<compile_context>
chip_gen: v6e
topology: v6e:2x2x1
jax: 0.10.0
libtpu: 0.0.40
codegen_flags: <defaults>
</compile_context>

<pallas_src>
import jax
import jax.numpy as jnp
from jax.experimental import pallas as pl
from jax.experimental.pallas import tpu as pltpu

# ----- module hyper-parameters -----
VOCAB_SIZE = 16
N_EMBD = 32            # n_embd
N_HIDDEN = 32          # n_hidden
BLOCK_SIZE = 8         # position-embedding table size (>= T)
USE_NE = True
# TODO(synk): EncoderHead.forward calls self.ratio_proj, which is never defined in the module;
#             only the use_len_ratio=False path (ratio_emb = 1) is implementable, so that runs here.
USE_LEN_RATIO = False
USE_AGENT_MASK = True

B, T, N = 2, 8, 4      # batch, time, agents
M = B * T * N          # 64 flattened token rows

_LN_EPS = 1e-5         # nn.LayerNorm default
_NORM_EPS = 1e-12      # guards the L2-normalize against a zero embedding row

SEG = 16               # lane width of each one-hot segment (>= VOCAB_SIZE, >= BLOCK_SIZE)
assert VOCAB_SIZE <= SEG and BLOCK_SIZE <= SEG

E, H = N_EMBD, N_HIDDEN
R_WC = 0               # wslab rows [0   :128) : condition Linear(3E->H) weight, K-padded to 4E
R_WIN = 4 * E          # wslab rows [128 :160) : in_proj Linear(E->H) weight
R_VEC = R_WIN + E      # wslab rows [160 :169) : bc1,gc1,bec1,b_in,g_in,be_in,Wc2[0..2]
W_ROWS = 176           # padded to a multiple of 8


# ------------------------------- Pallas kernel ---------------------------------
def encoder_head_kernel(idx_ref, gw_ref, wslab_ref, bc2_ref, out_ref):
    """Gridless kernel over all M rows.

    idx_ref   : (M, 4) int32  columns = [tok_idx, cond_start_idx, cond_end_idx, pos_idx]
    gw_ref    : (4*SEG, 4E) f32 block-diagonal gather weight:
                rows [0:16)  cols [0:32)  = L2-normalized embedding table
                rows [16:32) cols [32:64) = L2-normalized embedding table
                rows [32:48) cols [64:96) = L2-normalized embedding table
                rows [48:56) cols [96:128)= position embedding table
    wslab_ref : (176, H) f32  rows [0:128)=Wc1 zero-padded on K, [128:160)=W_in, [160:169)=vec params
    bc2_ref   : (4,) f32 SMEM, first 3 entries = Linear(H->3) bias
    out_ref   : (M, H)
    """
    # ---- embedding + position gather as ONE one-hot matmul (rides the idle MXU) ----
    idx = idx_ref[...]                                               # (M, 4) int32
    lane = jax.lax.broadcasted_iota(jnp.int32, (M, 4 * SEG), 1)
    seg = lane >> 4                                                  # which index column
    val = lane & (SEG - 1)                                           # vocab/pos id within segment
    sel = jnp.where(seg == 0, idx[:, 0:1],
          jnp.where(seg == 1, idx[:, 1:2],
          jnp.where(seg == 2, idx[:, 2:3], idx[:, 3:4])))
    onehot = (sel == val).astype(jnp.float32)                        # (M, 64)
    # lane-dense per-token slab: [tok | cond_s | cond_e | pos]  (M, 128)
    slab = jnp.dot(onehot, gw_ref[...], preferred_element_type=jnp.float32)

    tok = slab[:, 0:E]
    cs = slab[:, E:2 * E]
    ce = slab[:, 2 * E:3 * E]
    pos = slab[:, 3 * E:4 * E]

    # packed one-row parameters
    bc1 = wslab_ref[R_VEC + 0:R_VEC + 1, :]
    gc1 = wslab_ref[R_VEC + 1:R_VEC + 2, :]
    bec1 = wslab_ref[R_VEC + 2:R_VEC + 3, :]
    b_in = wslab_ref[R_VEC + 3:R_VEC + 4, :]
    g_in = wslab_ref[R_VEC + 4:R_VEC + 5, :]
    be_in = wslab_ref[R_VEC + 5:R_VEC + 6, :]
    w2_0 = wslab_ref[R_VEC + 6:R_VEC + 7, :]
    w2_1 = wslab_ref[R_VEC + 7:R_VEC + 8, :]
    w2_2 = wslab_ref[R_VEC + 8:R_VEC + 9, :]

    def layer_norm(x, g, b):
        # one-pass stats: var = E[x^2] - mu^2 (fine at O(1) activation scale)
        mu = jnp.mean(x, axis=-1, keepdims=True)
        var = jnp.mean(x * x, axis=-1, keepdims=True) - mu * mu
        return (x - mu) * jax.lax.rsqrt(var + _LN_EPS) * g + b

    def silu(x):
        # x * sigmoid(x); approx reciprocal -> EUP vrcp (free VLIW slot)
        return x * pl.reciprocal(1.0 + jnp.exp(-x), approx=True)

    # condition_proj[0..2]: Linear(3E->H) as a single K=128 lane-dense dot
    # (weight rows for the pos slot are zero, so pos lanes contribute nothing).
    h = jnp.dot(slab, wslab_ref[R_WC:R_WC + 4 * E, :],
                preferred_element_type=jnp.float32) + bc1
    h = silu(layer_norm(h, gc1, bec1))

    # condition_proj[3]: Linear(H->3) as three lane reductions, then stable softmax over 3 logits
    l0 = jnp.sum(h * w2_0, axis=-1, keepdims=True) + bc2_ref[0]
    l1 = jnp.sum(h * w2_1, axis=-1, keepdims=True) + bc2_ref[1]
    l2 = jnp.sum(h * w2_2, axis=-1, keepdims=True) + bc2_ref[2]
    mx = jnp.maximum(jnp.maximum(l0, l1), l2)
    e0, e1, e2 = jnp.exp(l0 - mx), jnp.exp(l1 - mx), jnp.exp(l2 - mx)
    inv = pl.reciprocal(e0 + e1 + e2, approx=True)
    # einsum('btnd,btndc->btnc'): softmax-weighted sum of the three E-wide chunks
    cond_emb = (e0 * tok + e1 * cs + e2 * ce) * inv

    # x = tok_emb + pos_emb + condition_emb ;  in_proj = SiLU(LayerNorm(Linear(E->H)))
    x = tok + pos + cond_emb
    y = jnp.dot(x, wslab_ref[R_WIN:R_WIN + E, :],
                preferred_element_type=jnp.float32) + b_in
    out_ref[...] = silu(layer_norm(y, g_in, be_in)).astype(out_ref.dtype)


# --------------------------- one-time parameter packing --------------------------
def pack_params(params):
    """Build the packed kernel operands ONCE (hoisted out of the per-call path)."""
    emb = params["emb"]
    if USE_NE:
        # NormalizedEmbedding commutes with the gather -> normalize the 16-row table once.
        emb = emb / jnp.sqrt(jnp.sum(emb * emb, axis=-1, keepdims=True) + _NORM_EPS)

    # block-diagonal gather weight (4*SEG, 4E): one-hot @ gw == [tok | cs | ce | pos]
    gw = jnp.zeros((4 * SEG, 4 * E), jnp.float32)
    gw = gw.at[0 * SEG:0 * SEG + VOCAB_SIZE, 0 * E:1 * E].set(emb)
    gw = gw.at[1 * SEG:1 * SEG + VOCAB_SIZE, 1 * E:2 * E].set(emb)
    gw = gw.at[2 * SEG:2 * SEG + VOCAB_SIZE, 2 * E:3 * E].set(emb)
    gw = gw.at[3 * SEG:3 * SEG + BLOCK_SIZE, 3 * E:4 * E].set(params["pos_emb"])

    wc_pad = jnp.concatenate([params["Wc1"], jnp.zeros((E, H), jnp.float32)], axis=0)  # (4E, H)
    vec_rows = jnp.stack([params["bc1"], params["gc1"], params["bec1"],
                          params["b_in"], params["g_in"], params["be_in"],
                          params["Wc2"][0], params["Wc2"][1], params["Wc2"][2]], axis=0)  # (9, H)
    wslab = jnp.concatenate(
        [wc_pad, params["W_in"], vec_rows,
         jnp.zeros((W_ROWS - (4 * E + E + 9), H), jnp.float32)], axis=0)                 # (176, H)

    bc2 = jnp.concatenate([params["bc2"], jnp.zeros((1,), jnp.float32)])                 # (4,) SMEM

    return {"gw": gw, "wslab": wslab, "bc2": bc2}


# ---------------------------------- wrapper -------------------------------------
@jax.jit
def encoder_head_forward(traj, cond, reagent_mask, packed):
    # tiny int32 index slab: [tok, cond_start, cond_end, pos] per flattened row
    pos_idx = jnp.broadcast_to(jnp.arange(T, dtype=jnp.int32)[None, :, None],
                               (B, T, N)).reshape(M)
    idx = jnp.stack([traj.reshape(M), cond[..., 0].reshape(M),
                     cond[..., 1].reshape(M), pos_idx], axis=1).astype(jnp.int32)  # (M, 4)

    x_flat = pl.pallas_call(
        encoder_head_kernel,
        out_shape=jax.ShapeDtypeStruct((M, H), jnp.float32),
        in_specs=[
            pl.BlockSpec(memory_space=pltpu.MemorySpace.VMEM),   # idx   (M, 4) int32
            pl.BlockSpec(memory_space=pltpu.MemorySpace.VMEM),   # gw    (64, 128)
            pl.BlockSpec(memory_space=pltpu.MemorySpace.VMEM),   # wslab (176, 32)
            pl.BlockSpec(memory_space=pltpu.MemorySpace.SMEM),   # bc2   (4,) scalar biases
        ],
        out_specs=pl.BlockSpec(memory_space=pltpu.MemorySpace.VMEM),
    )(idx, packed["gw"], packed["wslab"], packed["bc2"])

    x = x_flat.reshape(B, T, N, H)

    if USE_AGENT_MASK:
        agent_mask = reagent_mask
        both = jnp.logical_and(reagent_mask[..., :, None], reagent_mask[..., None, :])
        # ~(mask_i & mask_j) * -1e9 ; trivial 1 KiB op, left to XLA per the perf review
        cross_agent_mask = jnp.where(both, 0.0, -1.0e9).reshape(B * T, N, N)
    else:
        agent_mask = None
        cross_agent_mask = None

    return x, agent_mask, cross_agent_mask


# ----------------------------- pure-JAX reference -------------------------------
def reference(traj, cond, reagent_mask, params):
    emb_tab = params["emb"]

    def norm_emb(i):
        v = emb_tab[i]
        return v / jnp.sqrt(jnp.sum(v * v, axis=-1, keepdims=True) + _NORM_EPS)

    def ln(x, g, b):
        mu = x.mean(-1, keepdims=True)
        var = ((x - mu) ** 2).mean(-1, keepdims=True)
        return (x - mu) / jnp.sqrt(var + _LN_EPS) * g + b

    silu = lambda v: v * jax.nn.sigmoid(v)

    tok = norm_emb(traj)                    # ratio_emb == 1 (use_len_ratio=False)
    cs = norm_emb(cond[..., 0])
    ce = norm_emb(cond[..., 1])
    pos = params["pos_emb"][jnp.arange(T)].reshape(1, T, 1, -1)

    cat = jnp.concatenate([tok, cs, ce], axis=-1)                               # (B,T,N,3E)
    h = silu(ln(cat @ params["Wc1"] + params["bc1"], params["gc1"], params["bec1"]))
    logits = h @ params["Wc2"].T + params["bc2"]                                # (B,T,N,3)
    score = jax.nn.softmax(logits, axis=-1)
    cond_emb = jnp.einsum("btnd,btndc->btnc", score, cat.reshape(B, T, N, 3, N_EMBD))

    x = tok + pos + cond_emb
    x = silu(ln(x @ params["W_in"] + params["b_in"], params["g_in"], params["be_in"]))

    am = reagent_mask
    cam = ((~(am[..., :, None] & am[..., None, :]))
           .reshape(B * T, N, N).astype(jnp.float32) * -1.0e9)
    return x, am, cam


# ------------------------------------ main ---------------------------------------
if __name__ == "__main__":
    key = jax.random.PRNGKey(0)
    ks = jax.random.split(key, 16)

    params = {
        "emb": jax.random.normal(ks[0], (VOCAB_SIZE, E), jnp.float32),
        "pos_emb": 0.02 * jax.random.normal(ks[1], (BLOCK_SIZE, E), jnp.float32),
        # weights stored pre-transposed as (in_features, out_features), except Wc2 (torch (out,in))
        "Wc1": jax.random.normal(ks[2], (3 * E, H), jnp.float32) / jnp.sqrt(3.0 * E),
        "bc1": 0.01 * jax.random.normal(ks[3], (H,), jnp.float32),
        "gc1": 1.0 + 0.1 * jax.random.normal(ks[4], (H,), jnp.float32),
        "bec1": 0.1 * jax.random.normal(ks[5], (H,), jnp.float32),
        "Wc2": jax.random.normal(ks[6], (3, H), jnp.float32) / jnp.sqrt(1.0 * H),
        "bc2": 0.01 * jax.random.normal(ks[7], (3,), jnp.float32),
        "W_in": jax.random.normal(ks[8], (E, H), jnp.float32) / jnp.sqrt(1.0 * E),
        "b_in": 0.01 * jax.random.normal(ks[9], (H,), jnp.float32),
        "g_in": 1.0 + 0.1 * jax.random.normal(ks[10], (H,), jnp.float32),
        "be_in": 0.1 * jax.random.normal(ks[11], (H,), jnp.float32),
    }

    packed = pack_params(params)   # one-time packing, outside the per-call path

    traj = jax.random.randint(ks[12], (B, T, N), 0, VOCAB_SIZE, jnp.int32)       # batch['traj']
    cond = jax.random.randint(ks[13], (B, T, N, 2), 0, VOCAB_SIZE, jnp.int32)    # batch['cond']
    reagent_mask = jax.random.uniform(ks[14], (B, T, N)) > 0.3                   # batch['reagent_mask']

    x, am, cam = encoder_head_forward(traj, cond, reagent_mask, packed)
    jax.block_until_ready((x, am, cam))

    x_ref, am_ref, cam_ref = reference(traj, cond, reagent_mask, params)
    assert x.shape == (B, T, N, H) and cam.shape == (B * T, N, N)
    # tolerance widened 1e-4 -> 5e-3: approx (EUP) reciprocal in SiLU/softmax per the perf review
    assert jnp.allclose(x, x_ref, atol=5e-3, rtol=5e-3), float(jnp.max(jnp.abs(x - x_ref)))
    assert jnp.array_equal(am, am_ref)
    assert jnp.allclose(cam, cam_ref)

    print("KERNEL_OK")
</pallas_src>

<mosaic_0001>
module attributes {stable_mosaic.version = 11 : i64} {
  func.func @encoder_head_kernel(%arg0: memref<64x4xi32, #tpu.memory_space<vmem>>, %arg1: memref<64x128xf32, #tpu.memory_space<vmem>>, %arg2: memref<176x32xf32, #tpu.memory_space<vmem>>, %arg3: memref<4xf32, #tpu.memory_space<smem>>, %arg4: memref<64x32xf32, #tpu.memory_space<vmem>>) attributes {dimension_semantics = [], scalar_prefetch = 0 : i64, scratch_operands = 0 : i64, tpu.core_type = #tpu.core_type<tc>} {
    %c0 = arith.constant 0 : index
    %c0_0 = arith.constant 0 : index
    %0 = vector.load %arg0[%c0, %c0_0] : memref<64x4xi32, #tpu.memory_space<vmem>>, vector<64x4xi32>
    %1 = tpu.iota {dimensions = array<i32: 1>} : vector<64x64xi32>
    %c4_i32 = arith.constant 4 : i32
    %2 = vector.broadcast %c4_i32 : i32 to vector<64x64xi32>
    %3 = arith.shrsi %1, %2 : vector<64x64xi32>
    %c15_i32 = arith.constant 15 : i32
    %4 = vector.broadcast %c15_i32 : i32 to vector<64x64xi32>
    %5 = arith.andi %1, %4 : vector<64x64xi32>
    %c0_i32 = arith.constant 0 : i32
    %6 = vector.broadcast %c0_i32 : i32 to vector<64x64xi32>
    %7 = arith.cmpi eq, %3, %6 : vector<64x64xi32>
    %8 = vector.extract_strided_slice %0 {offsets = [0, 0], sizes = [64, 1], strides = [1, 1]} : vector<64x4xi32> to vector<64x1xi32>
    %c1_i32 = arith.constant 1 : i32
    %9 = vector.broadcast %c1_i32 : i32 to vector<64x64xi32>
    %10 = arith.cmpi eq, %3, %9 : vector<64x64xi32>
    %11 = vector.extract_strided_slice %0 {offsets = [0, 1], sizes = [64, 1], strides = [1, 1]} : vector<64x4xi32> to vector<64x1xi32>
    %c2_i32 = arith.constant 2 : i32
    %12 = vector.broadcast %c2_i32 : i32 to vector<64x64xi32>
    %13 = arith.cmpi eq, %3, %12 : vector<64x64xi32>
    %14 = vector.extract_strided_slice %0 {offsets = [0, 2], sizes = [64, 1], strides = [1, 1]} : vector<64x4xi32> to vector<64x1xi32>
    %15 = vector.extract_strided_slice %0 {offsets = [0, 3], sizes = [64, 1], strides = [1, 1]} : vector<64x4xi32> to vector<64x1xi32>
    %16 = vector.shape_cast %14 : vector<64x1xi32> to vector<64x1xi32>
    %17 = vector.broadcast %16 : vector<64x1xi32> to vector<64x64xi32>
    %18 = vector.shape_cast %15 : vector<64x1xi32> to vector<64x1xi32>
    %19 = vector.broadcast %18 : vector<64x1xi32> to vector<64x64xi32>
    %20 = arith.select %13, %17, %19 : vector<64x64xi1>, vector<64x64xi32>
    %21 = vector.shape_cast %11 : vector<64x1xi32> to vector<64x1xi32>
    %22 = vector.broadcast %21 : vector<64x1xi32> to vector<64x64xi32>
    %23 = arith.select %10, %22, %20 : vector<64x64xi1>, vector<64x64xi32>
    %24 = vector.shape_cast %8 : vector<64x1xi32> to vector<64x1xi32>
    %25 = vector.broadcast %24 : vector<64x1xi32> to vector<64x64xi32>
    %26 = arith.select %7, %25, %23 : vector<64x64xi1>, vector<64x64xi32>
    %27 = arith.cmpi eq, %26, %5 : vector<64x64xi32>
    %28 = arith.extui %27 : vector<64x64xi1> to vector<64x64xi32>
    %29 = arith.sitofp %28 : vector<64x64xi32> to vector<64x64xf32>
    %c0_1 = arith.constant 0 : index
    %c0_2 = arith.constant 0 : index
    %30 = vector.load %arg1[%c0_1, %c0_2] : memref<64x128xf32, #tpu.memory_space<vmem>>, vector<64x128xf32>
    %cst = arith.constant dense<0.000000e+00> : vector<64x128xf32>
    %31 = tpu.matmul %29, %30, %cst {dimension_numbers = #tpu.dot_dimension_numbers<[1], [0], [0], [1], [0, 0, 1, 1], [], []>} : vector<64x64xf32>, vector<64x128xf32>, vector<64x128xf32> -> vector<64x128xf32>
    %32 = vector.extract_strided_slice %31 {offsets = [0, 0], sizes = [64, 32], strides = [1, 1]} : vector<64x128xf32> to vector<64x32xf32>
    %33 = vector.extract_strided_slice %31 {offsets = [0, 32], sizes = [64, 32], strides = [1, 1]} : vector<64x128xf32> to vector<64x32xf32>
    %34 = vector.extract_strided_slice %31 {offsets = [0, 64], sizes = [64, 32], strides = [1, 1]} : vector<64x128xf32> to vector<64x32xf32>
    %35 = vector.extract_strided_slice %31 {offsets = [0, 96], sizes = [64, 32], strides = [1, 1]} : vector<64x128xf32> to vector<64x32xf32>
    %c160 = arith.constant 160 : index
    %c0_3 = arith.constant 0 : index
    %36 = vector.load %arg2[%c160, %c0_3] : memref<176x32xf32, #tpu.memory_space<vmem>>, vector<1x32xf32>
    %c161 = arith.constant 161 : index
    %c0_4 = arith.constant 0 : index
    %37 = vector.load %arg2[%c161, %c0_4] : memref<176x32xf32, #tpu.memory_space<vmem>>, vector<1x32xf32>
    %c162 = arith.constant 162 : index
    %c0_5 = arith.constant 0 : index
    %38 = vector.load %arg2[%c162, %c0_5] : memref<176x32xf32, #tpu.memory_space<vmem>>, vector<1x32xf32>
    %c163 = arith.constant 163 : index
    %c0_6 = arith.constant 0 : index
    %39 = vector.load %arg2[%c163, %c0_6] : memref<176x32xf32, #tpu.memory_space<vmem>>, vector<1x32xf32>
    %c164 = arith.constant 164 : index
    %c0_7 = arith.constant 0 : index
    %40 = vector.load %arg2[%c164, %c0_7] : memref<176x32xf32, #tpu.memory_space<vmem>>, vector<1x32xf32>
    %c165 = arith.constant 165 : index
    %c0_8 = arith.constant 0 : index
    %41 = vector.load %arg2[%c165, %c0_8] : memref<176x32xf32, #tpu.memory_space<vmem>>, vector<1x32xf32>
    %c166 = arith.constant 166 : index
    %c0_9 = arith.constant 0 : index
    %42 = vector.load %arg2[%c166, %c0_9] : memref<176x32xf32, #tpu.memory_space<vmem>>, vector<1x32xf32>
    %c167 = arith.constant 167 : index
    %c0_10 = arith.constant 0 : index
    %43 = vector.load %arg2[%c167, %c0_10] : memref<176x32xf32, #tpu.memory_space<vmem>>, vector<1x32xf32>
    %c168 = arith.constant 168 : index
    %c0_11 = arith.constant 0 : index
    %44 = vector.load %arg2[%c168, %c0_11] : memref<176x32xf32, #tpu.memory_space<vmem>>, vector<1x32xf32>
    %c0_12 = arith.constant 0 : index
    %c0_13 = arith.constant 0 : index
    %45 = vector.load %arg2[%c0_12, %c0_13] : memref<176x32xf32, #tpu.memory_space<vmem>>, vector<128x32xf32>
    %cst_14 = arith.constant dense<0.000000e+00> : vector<64x32xf32>
    %46 = tpu.matmul %31, %45, %cst_14 {dimension_numbers = #tpu.dot_dimension_numbers<[1], [0], [0], [1], [0, 0, 1, 1], [], []>} : vector<64x128xf32>, vector<128x32xf32>, vector<64x32xf32> -> vector<64x32xf32>
    %47 = vector.broadcast %36 : vector<1x32xf32> to vector<64x32xf32>
    %48 = arith.addf %46, %47 : vector<64x32xf32>
    %cst_15 = arith.constant dense<0.000000e+00> : vector<64xf32>
    %49 = vector.multi_reduction <add>, %48, %cst_15 [1] : vector<64x32xf32> to vector<64xf32>
    %50 = vector.shape_cast %49 : vector<64xf32> to vector<64x1xf32>
    %cst_16 = arith.constant 3.200000e+01 : f32
    %51 = vector.broadcast %cst_16 : f32 to vector<64x1xf32>
    %52 = arith.divf %50, %51 : vector<64x1xf32>
    %53 = arith.mulf %48, %48 : vector<64x32xf32>
    %cst_17 = arith.constant dense<0.000000e+00> : vector<64xf32>
    %54 = vector.multi_reduction <add>, %53, %cst_17 [1] : vector<64x32xf32> to vector<64xf32>
    %55 = vector.shape_cast %54 : vector<64xf32> to vector<64x1xf32>
    %cst_18 = arith.constant 3.200000e+01 : f32
    %56 = vector.broadcast %cst_18 : f32 to vector<64x1xf32>
    %57 = arith.divf %55, %56 : vector<64x1xf32>
    %58 = arith.mulf %52, %52 : vector<64x1xf32>
    %59 = arith.subf %57, %58 : vector<64x1xf32>
    %60 = vector.broadcast %52 : vector<64x1xf32> to vector<64x32xf32>
    %61 = arith.subf %48, %60 : vector<64x32xf32>
    %cst_19 = arith.constant 9.99999974E-6 : f32
    %62 = vector.broadcast %cst_19 : f32 to vector<64x1xf32>
    %63 = arith.addf %59, %62 : vector<64x1xf32>
    %64 = math.rsqrt %63 : vector<64x1xf32>
    %65 = vector.broadcast %64 : vector<64x1xf32> to vector<64x32xf32>
    %66 = arith.mulf %61, %65 : vector<64x32xf32>
    %67 = vector.broadcast %37 : vector<1x32xf32> to vector<64x32xf32>
    %68 = arith.mulf %66, %67 : vector<64x32xf32>
    %69 = vector.broadcast %38 : vector<1x32xf32> to vector<64x32xf32>
    %70 = arith.addf %68, %69 : vector<64x32xf32>
    %cst_20 = arith.constant 0.000000e+00 : f32
    %71 = vector.broadcast %cst_20 : f32 to vector<64x32xf32>
    %72 = arith.subf %71, %70 : vector<64x32xf32>
    %73 = math.exp %72 : vector<64x32xf32>
    %cst_21 = arith.constant 1.000000e+00 : f32
    %74 = vector.broadcast %cst_21 : f32 to vector<64x32xf32>
    %75 = arith.addf %74, %73 : vector<64x32xf32>
    %76 = tpu.reciprocal %75 {approx = true} : vector<64x32xf32> -> vector<64x32xf32>
    %77 = arith.mulf %70, %76 : vector<64x32xf32>
    %78 = vector.broadcast %42 : vector<1x32xf32> to vector<64x32xf32>
    %79 = arith.mulf %77, %78 : vector<64x32xf32>
    %cst_22 = arith.constant dense<0.000000e+00> : vector<64xf32>
    %80 = vector.multi_reduction <add>, %79, %cst_22 [1] : vector<64x32xf32> to vector<64xf32>
    %81 = vector.shape_cast %80 : vector<64xf32> to vector<64x1xf32>
    %c0_23 = arith.constant 0 : index
    %82 = memref.load %arg3[%c0_23] : memref<4xf32, #tpu.memory_space<smem>>
    %83 = vector.broadcast %82 : f32 to vector<64x1xf32>
    %84 = arith.addf %81, %83 : vector<64x1xf32>
    %85 = vector.broadcast %43 : vector<1x32xf32> to vector<64x32xf32>
    %86 = arith.mulf %77, %85 : vector<64x32xf32>
    %cst_24 = arith.constant dense<0.000000e+00> : vector<64xf32>
    %87 = vector.multi_reduction <add>, %86, %cst_24 [1] : vector<64x32xf32> to vector<64xf32>
    %88 = vector.shape_cast %87 : vector<64xf32> to vector<64x1xf32>
    %c1 = arith.constant 1 : index
    %89 = memref.load %arg3[%c1] : memref<4xf32, #tpu.memory_space<smem>>
    %90 = vector.broadcast %89 : f32 to vector<64x1xf32>
    %91 = arith.addf %88, %90 : vector<64x1xf32>
    %92 = vector.broadcast %44 : vector<1x32xf32> to vector<64x32xf32>
    %93 = arith.mulf %77, %92 : vector<64x32xf32>
    %cst_25 = arith.constant dense<0.000000e+00> : vector<64xf32>
    %94 = vector.multi_reduction <add>, %93, %cst_25 [1] : vector<64x32xf32> to vector<64xf32>
    %95 = vector.shape_cast %94 : vector<64xf32> to vector<64x1xf32>
    %c2 = arith.constant 2 : index
    %96 = memref.load %arg3[%c2] : memref<4xf32, #tpu.memory_space<smem>>
    %97 = vector.broadcast %96 : f32 to vector<64x1xf32>
    %98 = arith.addf %95, %97 : vector<64x1xf32>
    %99 = arith.maximumf %84, %91 : vector<64x1xf32>
    %100 = arith.maximumf %99, %98 : vector<64x1xf32>
    %101 = arith.subf %84, %100 : vector<64x1xf32>
    %102 = math.exp %101 : vector<64x1xf32>
    %103 = arith.subf %91, %100 : vector<64x1xf32>
    %104 = math.exp %103 : vector<64x1xf32>
    %105 = arith.subf %98, %100 : vector<64x1xf32>
    %106 = math.exp %105 : vector<64x1xf32>
    %107 = arith.addf %102, %104 : vector<64x1xf32>
    %108 = arith.addf %107, %106 : vector<64x1xf32>
    %109 = tpu.reciprocal %108 {approx = true} : vector<64x1xf32> -> vector<64x1xf32>
    %110 = vector.broadcast %102 : vector<64x1xf32> to vector<64x32xf32>
    %111 = arith.mulf %110, %32 : vector<64x32xf32>
    %112 = vector.broadcast %104 : vector<64x1xf32> to vector<64x32xf32>
    %113 = arith.mulf %112, %33 : vector<64x32xf32>
    %114 = arith.addf %111, %113 : vector<64x32xf32>
    %115 = vector.broadcast %106 : vector<64x1xf32> to vector<64x32xf32>
    %116 = arith.mulf %115, %34 : vector<64x32xf32>
    %117 = arith.addf %114, %116 : vector<64x32xf32>
    %118 = vector.broadcast %109 : vector<64x1xf32> to vector<64x32xf32>
    %119 = arith.mulf %117, %118 : vector<64x32xf32>
    %120 = arith.addf %32, %35 : vector<64x32xf32>
    %121 = arith.addf %120, %119 : vector<64x32xf32>
    %c128 = arith.constant 128 : index
    %c0_26 = arith.constant 0 : index
    %122 = vector.load %arg2[%c128, %c0_26] : memref<176x32xf32, #tpu.memory_space<vmem>>, vector<32x32xf32>
    %cst_27 = arith.constant dense<0.000000e+00> : vector<64x32xf32>
    %123 = tpu.matmul %121, %122, %cst_27 {dimension_numbers = #tpu.dot_dimension_numbers<[1], [0], [0], [1], [0, 0, 1, 1], [], []>} : vector<64x32xf32>, vector<32x32xf32>, vector<64x32xf32> -> vector<64x32xf32>
    %124 = vector.broadcast %39 : vector<1x32xf32> to vector<64x32xf32>
    %125 = arith.addf %123, %124 : vector<64x32xf32>
    %cst_28 = arith.constant dense<0.000000e+00> : vector<64xf32>
    %126 = vector.multi_reduction <add>, %125, %cst_28 [1] : vector<64x32xf32> to vector<64xf32>
    %127 = vector.shape_cast %126 : vector<64xf32> to vector<64x1xf32>
    %cst_29 = arith.constant 3.200000e+01 : f32
    %128 = vector.broadcast %cst_29 : f32 to vector<64x1xf32>
    %129 = arith.divf %127, %128 : vector<64x1xf32>
    %130 = arith.mulf %125, %125 : vector<64x32xf32>
    %cst_30 = arith.constant dense<0.000000e+00> : vector<64xf32>
    %131 = vector.multi_reduction <add>, %130, %cst_30 [1] : vector<64x32xf32> to vector<64xf32>
    %132 = vector.shape_cast %131 : vector<64xf32> to vector<64x1xf32>
    %cst_31 = arith.constant 3.200000e+01 : f32
    %133 = vector.broadcast %cst_31 : f32 to vector<64x1xf32>
    %134 = arith.divf %132, %133 : vector<64x1xf32>
    %135 = arith.mulf %129, %129 : vector<64x1xf32>
    %136 = arith.subf %134, %135 : vector<64x1xf32>
    %137 = vector.broadcast %129 : vector<64x1xf32> to vector<64x32xf32>
    %138 = arith.subf %125, %137 : vector<64x32xf32>
    %cst_32 = arith.constant 9.99999974E-6 : f32
    %139 = vector.broadcast %cst_32 : f32 to vector<64x1xf32>
    %140 = arith.addf %136, %139 : vector<64x1xf32>
    %141 = math.rsqrt %140 : vector<64x1xf32>
    %142 = vector.broadcast %141 : vector<64x1xf32> to vector<64x32xf32>
    %143 = arith.mulf %138, %142 : vector<64x32xf32>
    %144 = vector.broadcast %40 : vector<1x32xf32> to vector<64x32xf32>
    %145 = arith.mulf %143, %144 : vector<64x32xf32>
    %146 = vector.broadcast %41 : vector<1x32xf32> to vector<64x32xf32>
    %147 = arith.addf %145, %146 : vector<64x32xf32>
    %cst_33 = arith.constant 0.000000e+00 : f32
    %148 = vector.broadcast %cst_33 : f32 to vector<64x32xf32>
    %149 = arith.subf %148, %147 : vector<64x32xf32>
    %150 = math.exp %149 : vector<64x32xf32>
    %cst_34 = arith.constant 1.000000e+00 : f32
    %151 = vector.broadcast %cst_34 : f32 to vector<64x32xf32>
    %152 = arith.addf %151, %150 : vector<64x32xf32>
    %153 = tpu.reciprocal %152 {approx = true} : vector<64x32xf32> -> vector<64x32xf32>
    %154 = arith.mulf %147, %153 : vector<64x32xf32>
    %c0_35 = arith.constant 0 : index
    %c0_36 = arith.constant 0 : index
    %155 = vector.load %arg4[%c0_35, %c0_36] : memref<64x32xf32, #tpu.memory_space<vmem>>, vector<64x32xf32>
    tpu.vector_store %arg4[%c0_35, %c0_36], %154 {strides = array<i32>} : memref<64x32xf32, #tpu.memory_space<vmem>>, vector<64x32xf32>,
    return
  }
}

</mosaic_0001>

<llo_original>
// kernel: squeeze.2
$region0: #{squeeze.2}
  %s0 = inlined_call_operand.vmem [shape: s32[2,8,4,1], index: 0, kind: input, shape index: {}]
  %s1 = inlined_call_operand.vmem [shape: s32[64,1], index: 1, kind: output, shape index: {}]
  $region1: #{squeeze.2} parent=0
    #allocation0 [shape = 'u8[4096]{0}', space=vmem, size = 0x1000, scoped, tag = 'scoped mem for output reshape']
    %v2 = vld [vmem:[%s0] sm:$0x1]
    %vm3 = vcmask 31744
    %4 = vst.msk [vmem:[#allocation0] sm:$0x1] %vm3, %v2
    %s5 = scalar_lea.vmem %s0, 15
    %v6 = vld [vmem:[%s5] sm:$0x1]
    %7 = vrot.lane.b32.xlu0 %v6, 60
    %v8 = vpop.permute.xlu0 %7
    %vm9 = vcmask 523744
    %10 = vst.msk [vmem:[#allocation0] sm:$0x1] %vm9, %v8
    %s11 = scalar_lea.vmem %s0, 14
    %v12 = vld [vmem:[%s11] sm:$0x1]
    %13 = vrot.lane.b32.xlu0 %v12, 56
    %v14 = vpop.permute.xlu0 %13
    %vm15 = vcmask 490944
    %16 = vst.msk [vmem:[#allocation0] sm:$0x1] %vm15, %v14
    %s17 = scalar_lea.vmem %s0, 13
    %v18 = vld [vmem:[%s17] sm:$0x1]
    %19 = vrot.lane.b32.xlu0 %v18, 52
    %v20 = vpop.permute.xlu0 %19
    %vm21 = vcmask 458144
    %22 = vst.msk [vmem:[#allocation0] sm:$0x1] %vm21, %v20
    %s23 = scalar_lea.vmem %s0, 12
    %v24 = vld [vmem:[%s23] sm:$0x1]
    %25 = vrot.lane.b32.xlu0 %v24, 48
    %v26 = vpop.permute.xlu0 %25
    %vm27 = vcmask 425344
    %28 = vst.msk [vmem:[#allocation0] sm:$0x1] %vm27, %v26
    %s29 = scalar_lea.vmem %s0, 11
    %v30 = vld [vmem:[%s29] sm:$0x1]
    %31 = vrot.lane.b32.xlu0 %v30, 44
    %v32 = vpop.permute.xlu0 %31
    %vm33 = vcmask 392544
    %34 = vst.msk [vmem:[#allocation0] sm:$0x1] %vm33, %v32
    %s35 = scalar_lea.vmem %s0, 10
    %v36 = vld [vmem:[%s35] sm:$0x1]
    %37 = vrot.lane.b32.xlu0 %v36, 40
    %v38 = vpop.permute.xlu0 %37
    %vm39 = vcmask 359744
    %40 = vst.msk [vmem:[#allocation0] sm:$0x1] %vm39, %v38
    %s41 = scalar_lea.vmem %s0, 9
    %v42 = vld [vmem:[%s41] sm:$0x1]
    %43 = vrot.lane.b32.xlu0 %v42, 36
    %v44 = vpop.permute.xlu0 %43
    %vm45 = vcmask 326944
    %46 = vst.msk [vmem:[#allocation0] sm:$0x1] %vm45, %v44
    %s47 = scalar_lea.vmem %s0, 8
    %v48 = vld [vmem:[%s47] sm:$0x1]
    %49 = vrot.lane.b32.xlu0 %v48, 32
    %v50 = vpop.permute.xlu0 %49
    %vm51 = vcmask 294144
    %52 = vst.msk [vmem:[#allocation0] sm:$0x1] %vm51, %v50
    %s53 = scalar_lea.vmem %s0, 7
    %v54 = vld [vmem:[%s53] sm:$0x1]
    %55 = vrot.lane.b32.xlu0 %v54, 28
    %v56 = vpop.permute.xlu0 %55
    %vm57 = vcmask 261344
    %58 = vst.msk [vmem:[#allocation0] sm:$0x1] %vm57, %v56
    %s59 = scalar_lea.vmem %s0, 6
    %v60 = vld [vmem:[%s59] sm:$0x1]
    %61 = vrot.lane.b32.xlu0 %v60, 24
    %v62 = vpop.permute.xlu0 %61
    %vm63 = vcmask 228544
    %64 = vst.msk [vmem:[#allocation0] sm:$0x1] %vm63, %v62
    %s65 = scalar_lea.vmem %s0, 5
    %v66 = vld [vmem:[%s65] sm:$0x1]
    %67 = vrot.lane.b32.xlu0 %v66, 20
    %v68 = vpop.permute.xlu0 %67
    %vm69 = vcmask 195744
    %70 = vst.msk [vmem:[#allocation0] sm:$0x1] %vm69, %v68
    %s71 = scalar_lea.vmem %s0, 4
    %v72 = vld [vmem:[%s71] sm:$0x1]
    %73 = vrot.lane.b32.xlu0 %v72, 16
    %v74 = vpop.permute.xlu0 %73
    %vm75 = vcmask 162944
    %76 = vst.msk [vmem:[#allocation0] sm:$0x1] %vm75, %v74
    %s77 = scalar_lea.vmem %s0, 3
    %v78 = vld [vmem:[%s77] sm:$0x1]
    %79 = vrot.lane.b32.xlu0 %v78, 12
    %v80 = vpop.permute.xlu0 %79
    %vm81 = vcmask 130144
    %82 = vst.msk [vmem:[#allocation0] sm:$0x1] %vm81, %v80
    %s83 = scalar_lea.vmem %s0, 2
    %v84 = vld [vmem:[%s83] sm:$0x1]
    %85 = vrot.lane.b32.xlu0 %v84, 8
    %v86 = vpop.permute.xlu0 %85
    %vm87 = vcmask 97344
    %88 = vst.msk [vmem:[#allocation0] sm:$0x1] %vm87, %v86
    %s89 = scalar_lea.vmem %s0, 1
    %v90 = vld [vmem:[%s89] sm:$0x1]
    %91 = vrot.lane.b32.xlu0 %v90, 4
    %v92 = vpop.permute.xlu0 %91
    %vm93 = vcmask 64544
    %94 = vst.msk [vmem:[#allocation0] sm:$0x1] %vm93, %v92
    %s96 = sshll.u32 1, 1
    %s97 = ssub.s32 %s96, 1
    %v99 = vld [vmem:[#allocation0] sm:%s97]
    %s100 = sshll.u32 1, 1
    %s101 = ssub.s32 %s100, 1
    %102 = vst [vmem:[%s1] sm:%s101] %v99

// kernel: encoder_head_forward.1
$region0: #{encoder_head_forward.1}
  #allocation0 [shape = 'u32[]', space=smem, size = 0x4, offset = 0x4, fixed_abs, tag = 'smem constant byte address 0x4 - core index']
  #allocation1 [shape = 'u32[144,128]{1,0:T(1,128)}', space=vmem, size = 0x12000, scoped, tag = 'internal scratch']
  %s0 = inlined_call_operand.vmem [shape: s32[64,4], index: 0, kind: input, shape index: {}]
  %s1 = inlined_call_operand.vmem [shape: f32[64,128], index: 1, kind: input, shape index: {}]
  %s2 = inlined_call_operand.vmem [shape: f32[176,32], index: 2, kind: input, shape index: {}]
  %s3 = inlined_call_operand.vmem [shape: f32[4], index: 3, kind: input, shape index: {}]
  %s4 = inlined_call_operand.hbm [shape: f32[64,32], index: 4, kind: output, shape index: {}]
  %s5 = sld [smem:[#allocation0]]
  $region30: #{encoder_head_forward.1} parent=0
    _
  %s7 = ssub.s32 1, %s5
  %s8 = scalar_select 0, %s7, %s5
  $region1: #{encoder_head_forward.1} parent=0
    #allocation2 [shape = 'u8[512]{0}', space=smem, size = 0x200, scoped, tag = 'input window, operand 3, single buffered']
    #allocation3 [shape = 's32[1]{0}', space=sflag, size = 0x4, scoped, tag = 'scoped memory for encoder_head_forward.1']
    #allocation4 [shape = 's32[1]{0}', space=sflag, size = 0x4, scoped, tag = 'scoped memory for encoder_head_forward.1']
    #allocation5 [shape = 'u8[32768]{0}', space=vmem, size = 0x8000, scoped, tag = 'output window, operand 0, single buffered']
    %9 = vsyncpa [#allocation4], 0
    %10 = vsyncpa [#allocation3], 0
    // Predicated region
    $region2: #{encoder_head_forward.1} parent=1 // pred_check
      _
    $region3: #{encoder_head_forward.1} parent=1 // pred_check_branch
      %12 = sbr.rel (0) target = $region5
    $region4: #{encoder_head_forward.1} parent=1 // pred_region
      _
    $region5: #{encoder_head_forward.1} parent=1 // pred_fallthru
      _
    // Predicated region
    $region6: #{encoder_head_forward.1} parent=1 // pred_check
      _
    $region7: #{encoder_head_forward.1} parent=1 // pred_check_branch
      %14 = sbr.rel (0) target = $region9
    $region8: #{encoder_head_forward.1} parent=1 // pred_region
      _
    $region9: #{encoder_head_forward.1} parent=1 // pred_fallthru
      _
    // Predicated region
    $region10: #{encoder_head_forward.1} parent=1 // pred_check
      _
    $region11: #{encoder_head_forward.1} parent=1 // pred_check_branch
      %16 = sbr.rel (0) target = $region13
    $region12: #{encoder_head_forward.1} parent=1 // pred_region
      _
    $region13: #{encoder_head_forward.1} parent=1 // pred_fallthru
      _
    // Predicated region
    $region14: #{encoder_head_forward.1} parent=1 // pred_check
      _
    $region15: #{encoder_head_forward.1} parent=1 // pred_check_branch
      %18 = sbr.rel (0) target = $region17
    $region16: #{encoder_head_forward.1} parent=1 // pred_region
      %s20 = ssub.s32 16, 16
      %21 = vsyncadd [#allocation4], %s20
      %s23 = sshll.u32 %s3, 4
      %s24 = int_to_ptr.vmem [resolvable:$true] %s23
      %26 = dma.vmem_to_smem %s24, 16, [#allocation2], [#allocation4]
    $region17: #{encoder_head_forward.1} parent=1 // pred_fallthru
      _
    // Predicated region
    $region18: #{encoder_head_forward.1} parent=1 // pred_check
      _
    $region19: #{encoder_head_forward.1} parent=1 // pred_check_branch
      %28 = sbr.rel (0) target = $region21
    $region20: #{encoder_head_forward.1} parent=1 // pred_region
      %29 = dma.done [#allocation4], 16
    $region21: #{encoder_head_forward.1} parent=1 // pred_fallthru
      _
    %30 = sfence
    %v31 = vld [vmem:[%s0] sm:$0xff]
    %v32 = vld [vmem:[%s0 + $0x8] sm:$0xff]
    %v33 = vld [vmem:[%s0 + $0x10] sm:$0xff]
    %v34 = vld [vmem:[%s0 + $0x18] sm:$0xff]
    %v35 = vld [vmem:[%s0 + $0x20] sm:$0xff]
    %v36 = vld [vmem:[%s0 + $0x28] sm:$0xff]
    %v37 = vld [vmem:[%s0 + $0x30] sm:$0xff]
    %v38 = vld [vmem:[%s0 + $0x38] sm:$0xff]
    %v39 = vlaneseq
    %v40 = vand.u32 %v39, 127
    %v41 = vshra.s32 %v40, 4
    %v42 = vand.u32 %v40, 15
    %vm43 = vcmp.eq.s32.totalorder %v41, 0
    %vm44 = vcmp.eq.s32.totalorder %v41, 1
    %vm45 = vcmp.eq.s32.totalorder %v41, 2
    %46 = vset.pattern.permute.xlu0 2
    %47 = vperm.xlu0 %46, %v31
    %v48 = vpop.permute.xlu0 %47
    %49 = vset.pattern.permute.xlu0 2
    %50 = vperm.xlu0 %49, %v32
    %v51 = vpop.permute.xlu0 %50
    %52 = vset.pattern.permute.xlu0 2
    %53 = vperm.xlu0 %52, %v33
    %v54 = vpop.permute.xlu0 %53
    %55 = vset.pattern.permute.xlu0 2
    %56 = vperm.xlu0 %55, %v34
    %v57 = vpop.permute.xlu0 %56
    %58 = vset.pattern.permute.xlu0 2
    %59 = vperm.xlu0 %58, %v35
    %v60 = vpop.permute.xlu0 %59
    %61 = vset.pattern.permute.xlu0 2
    %62 = vperm.xlu0 %61, %v36
    %v63 = vpop.permute.xlu0 %62
    %64 = vset.pattern.permute.xlu0 2
    %65 = vperm.xlu0 %64, %v37
    %v66 = vpop.permute.xlu0 %65
    %67 = vset.pattern.permute.xlu0 2
    %68 = vperm.xlu0 %67, %v38
    %v69 = vpop.permute.xlu0 %68
    %70 = vset.pattern.permute.xlu0 3
    %71 = vperm.xlu0 %70, %v31
    %v72 = vpop.permute.xlu0 %71
    %73 = vset.pattern.permute.xlu0 3
    %74 = vperm.xlu0 %73, %v32
    %v75 = vpop.permute.xlu0 %74
    %76 = vset.pattern.permute.xlu0 3
    %77 = vperm.xlu0 %76, %v33
    %v78 = vpop.permute.xlu0 %77
    %79 = vset.pattern.permute.xlu0 3
    %80 = vperm.xlu0 %79, %v34
    %v81 = vpop.permute.xlu0 %80
    %82 = vset.pattern.permute.xlu0 3
    %83 = vperm.xlu0 %82, %v35
    %v84 = vpop.permute.xlu0 %83
    %85 = vset.pattern.permute.xlu0 3
    %86 = vperm.xlu0 %85, %v36
    %v87 = vpop.permute.xlu0 %86
    %88 = vset.pattern.permute.xlu0 3
    %89 = vperm.xlu0 %88, %v37
    %v90 = vpop.permute.xlu0 %89
    %91 = vset.pattern.permute.xlu0 3
    %92 = vperm.xlu0 %91, %v38
    %v93 = vpop.permute.xlu0 %92
    %v94 = vsel %vm45, %v48, %v72
    %v95 = vsel %vm45, %v51, %v75
    %v96 = vsel %vm45, %v54, %v78
    %v97 = vsel %vm45, %v57, %v81
    %v98 = vsel %vm45, %v60, %v84
    %v99 = vsel %vm45, %v63, %v87
    %v100 = vsel %vm45, %v66, %v90
    %v101 = vsel %vm45, %v69, %v93
    %102 = vset.pattern.permute.xlu0 1
    %103 = vperm.xlu0 %102, %v31
    %v104 = vpop.permute.xlu0 %103
    %105 = vset.pattern.permute.xlu0 1
    %106 = vperm.xlu0 %105, %v32
    %v107 = vpop.permute.xlu0 %106
    %108 = vset.pattern.permute.xlu0 1
    %109 = vperm.xlu0 %108, %v33
    %v110 = vpop.permute.xlu0 %109
    %111 = vset.pattern.permute.xlu0 1
    %112 = vperm.xlu0 %111, %v34
    %v113 = vpop.permute.xlu0 %112
    %114 = vset.pattern.permute.xlu0 1
    %115 = vperm.xlu0 %114, %v35
    %v116 = vpop.permute.xlu0 %115
    %117 = vset.pattern.permute.xlu0 1
    %118 = vperm.xlu0 %117, %v36
    %v119 = vpop.permute.xlu0 %118
    %120 = vset.pattern.permute.xlu0 1
    %121 = vperm.xlu0 %120, %v37
    %v122 = vpop.permute.xlu0 %121
    %123 = vset.pattern.permute.xlu0 1
    %124 = vperm.xlu0 %123, %v38
    %v125 = vpop.permute.xlu0 %124
    %v126 = vsel %vm44, %v104, %v94
    %v127 = vsel %vm44, %v107, %v95
    %v128 = vsel %vm44, %v110, %v96
    %v129 = vsel %vm44, %v113, %v97
    %v130 = vsel %vm44, %v116, %v98
    %v131 = vsel %vm44, %v119, %v99
    %v132 = vsel %vm44, %v122, %v100
    %v133 = vsel %vm44, %v125, %v101
    %134 = vset.pattern.permute.xlu0 0
    %135 = vperm.xlu0 %134, %v31
    %v136 = vpop.permute.xlu0 %135
    %137 = vset.pattern.permute.xlu0 0
    %138 = vperm.xlu0 %137, %v32
    %v139 = vpop.permute.xlu0 %138
    %140 = vset.pattern.permute.xlu0 0
    %141 = vperm.xlu0 %140, %v33
    %v142 = vpop.permute.xlu0 %141
    %143 = vset.pattern.permute.xlu0 0
    %144 = vperm.xlu0 %143, %v34
    %v145 = vpop.permute.xlu0 %144
    %146 = vset.pattern.permute.xlu0 0
    %147 = vperm.xlu0 %146, %v35
    %v148 = vpop.permute.xlu0 %147
    %149 = vset.pattern.permute.xlu0 0
    %150 = vperm.xlu0 %149, %v36
    %v151 = vpop.permute.xlu0 %150
    %152 = vset.pattern.permute.xlu0 0
    %153 = vperm.xlu0 %152, %v37
    %v154 = vpop.permute.xlu0 %153
    %155 = vset.pattern.permute.xlu0 0
    %156 = vperm.xlu0 %155, %v38
    %v157 = vpop.permute.xlu0 %156
    %v158 = vsel %vm43, %v136, %v126
    %v159 = vsel %vm43, %v139, %v127
    %v160 = vsel %vm43, %v142, %v128
    %v161 = vsel %vm43, %v145, %v129
    %v162 = vsel %vm43, %v148, %v130
    %v163 = vsel %vm43, %v151, %v131
    %v164 = vsel %vm43, %v154, %v132
    %v165 = vsel %vm43, %v157, %v133
    %vm166 = vcmp.eq.s32.totalorder %v158, %v42
    %vm167 = vcmp.eq.s32.totalorder %v159, %v42
    %vm168 = vcmp.eq.s32.totalorder %v160, %v42
    %vm169 = vcmp.eq.s32.totalorder %v161, %v42
    %vm170 = vcmp.eq.s32.totalorder %v162, %v42
    %vm171 = vcmp.eq.s32.totalorder %v163, %v42
    %vm172 = vcmp.eq.s32.totalorder %v164, %v42
    %vm173 = vcmp.eq.s32.totalorder %v165, %v42
    %v174 = vsel %vm166, 1, 0
    %v175 = vsel %vm167, 1, 0
    %v176 = vsel %vm168, 1, 0
    %v177 = vsel %vm169, 1, 0
    %v178 = vsel %vm170, 1, 0
    %v179 = vsel %vm171, 1, 0
    %v180 = vsel %vm172, 1, 0
    %v181 = vsel %vm173, 1, 0
    %v182 = vcvt.s32.f32 %v174
    %v183 = vcvt.s32.f32 %v175
    %v184 = vcvt.s32.f32 %v176
    %v185 = vcvt.s32.f32 %v177
    %v186 = vcvt.s32.f32 %v178
    %v187 = vcvt.s32.f32 %v179
    %v188 = vcvt.s32.f32 %v180
    %v189 = vcvt.s32.f32 %v181
    %v190 = vld [vmem:[%s1] sm:$0xff]
    %v191 = vld [vmem:[%s1 + $0x8] sm:$0xff]
    %v192 = vld [vmem:[%s1 + $0x10] sm:$0xff]
    %v193 = vld [vmem:[%s1 + $0x18] sm:$0xff]
    %v194 = vld [vmem:[%s1 + $0x20] sm:$0xff]
    %v195 = vld [vmem:[%s1 + $0x28] sm:$0xff]
    %v196 = vld [vmem:[%s1 + $0x30] sm:$0xff]
    %v197 = vld [vmem:[%s1 + $0x38] sm:$0xff]
    %vm198 = vcmask 523264
    %v200 = vsel %vm198, %v182, 0
    %v203 = vsel %vm198, %v183, 0
    %v206 = vsel %vm198, %v184, 0
    %v209 = vsel %vm198, %v185, 0
    %v212 = vsel %vm198, %v186, 0
    %v215 = vsel %vm198, %v187, 0
    %v218 = vsel %vm198, %v188, 0
    %v221 = vsel %vm198, %v189, 0
    %223 = vmatprep.subr.mxu0 0.0
    %224 = vmatpush1.msra.mxu0 0.0
    %225 = vmatprep.subr.mxu0 0.0
    %226 = vmatpush1.msra.mxu0 0.0
    %227 = vmatprep.subr.mxu0 0.0
    %228 = vmatpush1.msra.mxu0 0.0
    %229 = vmatprep.subr.mxu0 0.0
    %230 = vmatpush1.msra.mxu0 0.0
    %231 = vmatprep.subr.mxu0 0.0
    %232 = vmatpush1.msra.mxu0 0.0
    %233 = vmatprep.subr.mxu0 0.0
    %234 = vmatpush1.msra.mxu0 0.0
    %235 = vmatprep.subr.mxu0 0.0
    %236 = vmatpush1.msra.mxu0 0.0
    %237 = vmatprep.subr.mxu0 0.0
    %238 = vmatpush1.msra.mxu0 0.0
    %239 = vmatprep.subr.mxu0 0.0
    %240 = vmatpush1.msra.mxu0 %v197
    %241 = vmatprep.subr.mxu0 0.0
    %242 = vmatpush1.msra.mxu0 %v196
    %243 = vmatprep.subr.mxu0 0.0
    %244 = vmatpush1.msra.mxu0 %v195
    %245 = vmatprep.subr.mxu0 0.0
    %246 = vmatpush1.msra.mxu0 %v194
    %247 = vmatprep.subr.mxu0 0.0
    %248 = vmatpush1.msra.mxu0 %v193
    %249 = vmatprep.subr.mxu0 0.0
    %250 = vmatpush1.msra.mxu0 %v192
    %251 = vmatprep.subr.mxu0 0.0
    %252 = vmatpush1.msra.mxu0 %v191
    %253 = vmatprep.subr.mxu0 0.0
    %254 = vmatpush1.msra.mxu0 %v190
    %255 = vmatprep.subr.mxu0 0.0
    %256 = vmatpush2.msra.mxu0 0.0
    %257 = vmatprep.subr.mxu0 0.0
    %258 = vmatpush2.msra.mxu0 0.0
    %259 = vmatprep.subr.mxu0 0.0
    %260 = vmatpush2.msra.mxu0 0.0
    %261 = vmatprep.subr.mxu0 0.0
    %262 = vmatpush2.msra.mxu0 0.0
    %263 = vmatprep.subr.mxu0 0.0
    %264 = vmatpush2.msra.mxu0 0.0
    %265 = vmatprep.subr.mxu0 0.0
    %266 = vmatpush2.msra.mxu0 0.0
    %267 = vmatprep.subr.mxu0 0.0
    %268 = vmatpush2.msra.mxu0 0.0
    %269 = vmatprep.subr.mxu0 0.0
    %270 = vmatpush2.msra.mxu0 0.0
    %271 = vmatprep.subr.mxu0 0.0
    %272 = vmatpush2.msra.mxu0 0.0
    %273 = vmatprep.subr.mxu0 0.0
    %274 = vmatpush2.msra.mxu0 0.0
    %275 = vmatprep.subr.mxu0 0.0
    %276 = vmatpush2.msra.mxu0 0.0
    %277 = vmatprep.subr.mxu0 0.0
    %278 = vmatpush2.msra.mxu0 0.0
    %279 = vmatprep.subr.mxu0 0.0
    %280 = vmatpush2.msra.mxu0 0.0
    %281 = vmatprep.subr.mxu0 0.0
    %282 = vmatpush2.msra.mxu0 0.0
    %283 = vmatprep.subr.mxu0 0.0
    %284 = vmatpush2.msra.mxu0 0.0
    %285 = vmatprep.subr.mxu0 0.0
    %286 = vmatpush2.msra.mxu0 0.0
    %287 = vmatprep.mubr.f32.mxu0 0.0
    %288 = vmatmul.mubr.f32.gmra.mxu0 %v200
    %v289 = vpop.f32.mrf.mxu0
    %v290 = vadd.f32 0.0, %v289
    %v291 = vpop.f32.mrf.mxu0
    %292 = vmatprep.mubr.f32.mxu0 0.0
    %293 = vmatmul.mubr.f32.gmra.mxu0 %v203
    %v294 = vpop.f32.mrf.mxu0
    %v295 = vadd.f32 0.0, %v294
    %v296 = vpop.f32.mrf.mxu0
    %297 = vmatprep.mubr.f32.mxu0 0.0
    %298 = vmatmul.mubr.f32.gmra.mxu0 %v206
    %v299 = vpop.f32.mrf.mxu0
    %v300 = vadd.f32 0.0, %v299
    %v301 = vpop.f32.mrf.mxu0
    %302 = vmatprep.mubr.f32.mxu0 0.0
    %303 = vmatmul.mubr.f32.gmra.mxu0 %v209
    %v304 = vpop.f32.mrf.mxu0
    %v305 = vadd.f32 0.0, %v304
    %v306 = vpop.f32.mrf.mxu0
    %307 = vmatprep.mubr.f32.mxu0 0.0
    %308 = vmatmul.mubr.f32.gmra.mxu0 %v212
    %v309 = vpop.f32.mrf.mxu0
    %v310 = vadd.f32 0.0, %v309
    %v311 = vpop.f32.mrf.mxu0
    %312 = vmatprep.mubr.f32.mxu0 0.0
    %313 = vmatmul.mubr.f32.gmra.mxu0 %v215
    %v314 = vpop.f32.mrf.mxu0
    %v315 = vadd.f32 0.0, %v314
    %v316 = vpop.f32.mrf.mxu0
    %317 = vmatprep.mubr.f32.mxu0 0.0
    %318 = vmatmul.mubr.f32.gmra.mxu0 %v218
    %v319 = vpop.f32.mrf.mxu0
    %v320 = vadd.f32 0.0, %v319
    %v321 = vpop.f32.mrf.mxu0
    %322 = vmatprep.mubr.f32.mxu0 0.0
    %323 = vmatmul.mubr.f32.gmra.mxu0 %v221
    %v324 = vpop.f32.mrf.mxu0
    %v325 = vadd.f32 0.0, %v324
    %v326 = vpop.f32.mrf.mxu0
    %327 = vdwg.mxu0
    %v328 = vld [vmem:[%s2 + $0xa0] sm:$0x1]
    %v329 = vld [vmem:[%s2 + $0xa1] sm:$0x1]
    %v330 = vld [vmem:[%s2 + $0xa2] sm:$0x1]
    %v331 = vld [vmem:[%s2 + $0xa3] sm:$0x1]
    %v332 = vld [vmem:[%s2 + $0xa4] sm:$0x1]
    %v333 = vld [vmem:[%s2 + $0xa5] sm:$0x1]
    %v334 = vld [vmem:[%s2 + $0xa6] sm:$0x1]
    %v335 = vld [vmem:[%s2 + $0xa7] sm:$0x1]
    %v336 = vld [vmem:[%s2 + $0xa8] sm:$0x1]
    %v337 = vld [vmem:[%s2] sm:$0xff]
    %v338 = vld [vmem:[%s2 + $0x8] sm:$0xff]
    %v339 = vld [vmem:[%s2 + $0x10] sm:$0xff]
    %v340 = vld [vmem:[%s2 + $0x18] sm:$0xff]
    %v341 = vld [vmem:[%s2 + $0x20] sm:$0xff]
    %v342 = vld [vmem:[%s2 + $0x28] sm:$0xff]
    %v343 = vld [vmem:[%s2 + $0x30] sm:$0xff]
    %v344 = vld [vmem:[%s2 + $0x38] sm:$0xff]
    %v345 = vld [vmem:[%s2 + $0x40] sm:$0xff]
    %v346 = vld [vmem:[%s2 + $0x48] sm:$0xff]
    %v347 = vld [vmem:[%s2 + $0x50] sm:$0xff]
    %v348 = vld [vmem:[%s2 + $0x58] sm:$0xff]
    %v349 = vld [vmem:[%s2 + $0x60] sm:$0xff]
    %v350 = vld [vmem:[%s2 + $0x68] sm:$0xff]
    %v351 = vld [vmem:[%s2 + $0x70] sm:$0xff]
    %v352 = vld [vmem:[%s2 + $0x78] sm:$0xff]
    %v353 = vlaneseq
    %v354 = vshrl.u32 %v353, 7
    %v355 = vsub.s32 0, %v354
    %v356 = vrot.slane %v328, %v355
    %357 = vmatprep.subr.mxu0 0.0
    %358 = vmatpush1.msra.mxu0 %v352
    %359 = vmatprep.subr.mxu0 0.0
    %360 = vmatpush1.msra.mxu0 %v351
    %361 = vmatprep.subr.mxu0 0.0
    %362 = vmatpush1.msra.mxu0 %v350
    %363 = vmatprep.subr.mxu0 0.0
    %364 = vmatpush1.msra.mxu0 %v349
    %365 = vmatprep.subr.mxu0 0.0
    %366 = vmatpush1.msra.mxu0 %v348
    %367 = vmatprep.subr.mxu0 0.0
    %368 = vmatpush1.msra.mxu0 %v347
    %369 = vmatprep.subr.mxu0 0.0
    %370 = vmatpush1.msra.mxu0 %v346
    %371 = vmatprep.subr.mxu0 0.0
    %372 = vmatpush1.msra.mxu0 %v345
    %373 = vmatprep.subr.mxu0 0.0
    %374 = vmatpush1.msra.mxu0 %v344
    %375 = vmatprep.subr.mxu0 0.0
    %376 = vmatpush1.msra.mxu0 %v343
    %377 = vmatprep.subr.mxu0 0.0
    %378 = vmatpush1.msra.mxu0 %v342
    %379 = vmatprep.subr.mxu0 0.0
    %380 = vmatpush1.msra.mxu0 %v341
    %381 = vmatprep.subr.mxu0 0.0
    %382 = vmatpush1.msra.mxu0 %v340
    %383 = vmatprep.subr.mxu0 0.0
    %384 = vmatpush1.msra.mxu0 %v339
    %385 = vmatprep.subr.mxu0 0.0
    %386 = vmatpush1.msra.mxu0 %v338
    %387 = vmatprep.subr.mxu0 0.0
    %388 = vmatpush1.msra.mxu0 %v337
    %389 = vmatprep.subr.mxu0 0.0
    %390 = vmatpush2.msra.mxu0 0.0
    %391 = vmatprep.subr.mxu0 0.0
    %392 = vmatpush2.msra.mxu0 0.0
    %393 = vmatprep.subr.mxu0 0.0
    %394 = vmatpush2.msra.mxu0 0.0
    %395 = vmatprep.subr.mxu0 0.0
    %396 = vmatpush2.msra.mxu0 0.0
    %397 = vmatprep.subr.mxu0 0.0
    %398 = vmatpush2.msra.mxu0 0.0
    %399 = vmatprep.subr.mxu0 0.0
    %400 = vmatpush2.msra.mxu0 0.0
    %401 = vmatprep.subr.mxu0 0.0
    %402 = vmatpush2.msra.mxu0 0.0
    %403 = vmatprep.subr.mxu0 0.0
    %404 = vmatpush2.msra.mxu0 0.0
    %405 = vmatprep.subr.mxu0 0.0
    %406 = vmatpush2.msra.mxu0 0.0
    %407 = vmatprep.subr.mxu0 0.0
    %408 = vmatpush2.msra.mxu0 0.0
    %409 = vmatprep.subr.mxu0 0.0
    %410 = vmatpush2.msra.mxu0 0.0
    %411 = vmatprep.subr.mxu0 0.0
    %412 = vmatpush2.msra.mxu0 0.0
    %413 = vmatprep.subr.mxu0 0.0
    %414 = vmatpush2.msra.mxu0 0.0
    %415 = vmatprep.subr.mxu0 0.0
    %416 = vmatpush2.msra.mxu0 0.0
    %417 = vmatprep.subr.mxu0 0.0
    %418 = vmatpush2.msra.mxu0 0.0
    %419 = vmatprep.subr.mxu0 0.0
    %420 = vmatpush2.msra.mxu0 0.0
    %421 = vmatprep.mubr.f32.mxu0 0.0
    %422 = vmatmul.mubr.f32.gmra.mxu0 %v290
    %v423 = vpop.f32.mrf.mxu0
    %v424 = vadd.f32 %v356, %v423
    %v425 = vpop.f32.mrf.mxu0
    %426 = vmatprep.mubr.f32.mxu0 0.0
    %427 = vmatmul.mubr.f32.gmra.mxu0 %v295
    %v428 = vpop.f32.mrf.mxu0
    %v429 = vadd.f32 %v356, %v428
    %v430 = vpop.f32.mrf.mxu0
    %431 = vmatprep.mubr.f32.mxu0 0.0
    %432 = vmatmul.mubr.f32.gmra.mxu0 %v300
    %v433 = vpop.f32.mrf.mxu0
    %v434 = vadd.f32 %v356, %v433
    %v435 = vpop.f32.mrf.mxu0
    %436 = vmatprep.mubr.f32.mxu0 0.0
    %437 = vmatmul.mubr.f32.gmra.mxu0 %v305
    %v438 = vpop.f32.mrf.mxu0
    %v439 = vadd.f32 %v356, %v438
    %v440 = vpop.f32.mrf.mxu0
    %441 = vmatprep.mubr.f32.mxu0 0.0
    %442 = vmatmul.mubr.f32.gmra.mxu0 %v310
    %v443 = vpop.f32.mrf.mxu0
    %v444 = vadd.f32 %v356, %v443
    %v445 = vpop.f32.mrf.mxu0
    %446 = vmatprep.mubr.f32.mxu0 0.0
    %447 = vmatmul.mubr.f32.gmra.mxu0 %v315
    %v448 = vpop.f32.mrf.mxu0
    %v449 = vadd.f32 %v356, %v448
    %v450 = vpop.f32.mrf.mxu0
    %451 = vmatprep.mubr.f32.mxu0 0.0
    %452 = vmatmul.mubr.f32.gmra.mxu0 %v320
    %v453 = vpop.f32.mrf.mxu0
    %v454 = vadd.f32 %v356, %v453
    %v455 = vpop.f32.mrf.mxu0
    %456 = vmatprep.mubr.f32.mxu0 0.0
    %457 = vmatmul.mubr.f32.gmra.mxu0 %v325
    %v458 = vpop.f32.mrf.mxu0
    %v459 = vadd.f32 %v356, %v458
    %v460 = vpop.f32.mrf.mxu0
    %461 = vdwg.mxu0
    %vm462 = vcmask 261120
    %v463 = vsel %vm462, %v424, 0.0
    %464 = vadd.xlane.f32.xlu0 %v463
    %v465 = vpop.xlane.xlu0 %464
    %v466 = vsel %vm462, %v429, 0.0
    %467 = vadd.xlane.f32.xlu0 %v466
    %v468 = vpop.xlane.xlu0 %467
    %v469 = vsel %vm462, %v434, 0.0
    %470 = vadd.xlane.f32.xlu0 %v469
    %v471 = vpop.xlane.xlu0 %470
    %v472 = vsel %vm462, %v439, 0.0
    %473 = vadd.xlane.f32.xlu0 %v472
    %v474 = vpop.xlane.xlu0 %473
    %v475 = vsel %vm462, %v444, 0.0
    %476 = vadd.xlane.f32.xlu0 %v475
    %v477 = vpop.xlane.xlu0 %476
    %v478 = vsel %vm462, %v449, 0.0
    %479 = vadd.xlane.f32.xlu0 %v478
    %v480 = vpop.xlane.xlu0 %479
    %v481 = vsel %vm462, %v454, 0.0
    %482 = vadd.xlane.f32.xlu0 %v481
    %v483 = vpop.xlane.xlu0 %482
    %v484 = vsel %vm462, %v459, 0.0
    %485 = vadd.xlane.f32.xlu0 %v484
    %v486 = vpop.xlane.xlu0 %485
    %v487 = vrcp.pop 32.0
    %v488 = vmul.f32 %v465, %v487
    %v489 = vmul.f32 %v468, %v487
    %v490 = vmul.f32 %v471, %v487
    %v491 = vmul.f32 %v474, %v487
    %v492 = vmul.f32 %v477, %v487
    %v493 = vmul.f32 %v480, %v487
    %v494 = vmul.f32 %v483, %v487
    %v495 = vmul.f32 %v486, %v487
    %v496 = vmul.f32 %v424, %v424
    %v497 = vmul.f32 %v429, %v429
    %v498 = vmul.f32 %v434, %v434
    %v499 = vmul.f32 %v439, %v439
    %v500 = vmul.f32 %v444, %v444
    %v501 = vmul.f32 %v449, %v449
    %v502 = vmul.f32 %v454, %v454
    %v503 = vmul.f32 %v459, %v459
    %v504 = vsel %vm462, %v496, 0.0
    %505 = vadd.xlane.f32.xlu0 %v504
    %v506 = vpop.xlane.xlu0 %505
    %v507 = vsel %vm462, %v497, 0.0
    %508 = vadd.xlane.f32.xlu0 %v507
    %v509 = vpop.xlane.xlu0 %508
    %v510 = vsel %vm462, %v498, 0.0
    %511 = vadd.xlane.f32.xlu0 %v510
    %v512 = vpop.xlane.xlu0 %511
    %v513 = vsel %vm462, %v499, 0.0
    %514 = vadd.xlane.f32.xlu0 %v513
    %v515 = vpop.xlane.xlu0 %514
    %v516 = vsel %vm462, %v500, 0.0
    %517 = vadd.xlane.f32.xlu0 %v516
    %v518 = vpop.xlane.xlu0 %517
    %v519 = vsel %vm462, %v501, 0.0
    %520 = vadd.xlane.f32.xlu0 %v519
    %v521 = vpop.xlane.xlu0 %520
    %v522 = vsel %vm462, %v502, 0.0
    %523 = vadd.xlane.f32.xlu0 %v522
    %v524 = vpop.xlane.xlu0 %523
    %v525 = vsel %vm462, %v503, 0.0
    %526 = vadd.xlane.f32.xlu0 %v525
    %v527 = vpop.xlane.xlu0 %526
    %v528 = vmul.f32 %v506, %v487
    %v529 = vmul.f32 %v509, %v487
    %v530 = vmul.f32 %v512, %v487
    %v531 = vmul.f32 %v515, %v487
    %v532 = vmul.f32 %v518, %v487
    %v533 = vmul.f32 %v521, %v487
    %v534 = vmul.f32 %v524, %v487
    %v535 = vmul.f32 %v527, %v487
    %v536 = vmul.f32 %v488, %v488
    %v537 = vmul.f32 %v489, %v489
    %v538 = vmul.f32 %v490, %v490
    %v539 = vmul.f32 %v491, %v491
    %v540 = vmul.f32 %v492, %v492
    %v541 = vmul.f32 %v493, %v493
    %v542 = vmul.f32 %v494, %v494
    %v543 = vmul.f32 %v495, %v495
    %v544 = vsub.f32 %v528, %v536
    %v545 = vsub.f32 %v529, %v537
    %v546 = vsub.f32 %v530, %v538
    %v547 = vsub.f32 %v531, %v539
    %v548 = vsub.f32 %v532, %v540
    %v549 = vsub.f32 %v533, %v541
    %v550 = vsub.f32 %v534, %v542
    %v551 = vsub.f32 %v535, %v543
    %v552 = vsub.f32 %v424, %v488
    %v553 = vsub.f32 %v429, %v489
    %v554 = vsub.f32 %v434, %v490
    %v555 = vsub.f32 %v439, %v491
    %v556 = vsub.f32 %v444, %v492
    %v557 = vsub.f32 %v449, %v493
    %v558 = vsub.f32 %v454, %v494
    %v559 = vsub.f32 %v459, %v495
    %v560 = vadd.f32 %v544, 1e-05
    %v561 = vadd.f32 %v545, 1e-05
    %v562 = vadd.f32 %v546, 1e-05
    %v563 = vadd.f32 %v547, 1e-05
    %v564 = vadd.f32 %v548, 1e-05
    %v565 = vadd.f32 %v549, 1e-05
    %v566 = vadd.f32 %v550, 1e-05
    %v567 = vadd.f32 %v551, 1e-05
    %v568 = vrsqrt.pop %v560
    %v569 = vrsqrt.pop %v561
    %v570 = vrsqrt.pop %v562
    %v571 = vrsqrt.pop %v563
    %v572 = vrsqrt.pop %v564
    %v573 = vrsqrt.pop %v565
    %v574 = vrsqrt.pop %v566
    %v575 = vrsqrt.pop %v567
    %v576 = vmul.f32 %v552, %v568
    %v577 = vmul.f32 %v553, %v569
    %v578 = vmul.f32 %v554, %v570
    %v579 = vmul.f32 %v555, %v571
    %v580 = vmul.f32 %v556, %v572
    %v581 = vmul.f32 %v557, %v573
    %v582 = vmul.f32 %v558, %v574
    %v583 = vmul.f32 %v559, %v575
    %v584 = vlaneseq
    %v585 = vshrl.u32 %v584, 7
    %v586 = vsub.s32 0, %v585
    %v587 = vrot.slane %v329, %v586
    %v588 = vmul.f32 %v576, %v587
    %v589 = vmul.f32 %v577, %v587
    %v590 = vmul.f32 %v578, %v587
    %v591 = vmul.f32 %v579, %v587
    %v592 = vmul.f32 %v580, %v587
    %v593 = vmul.f32 %v581, %v587
    %v594 = vmul.f32 %v582, %v587
    %v595 = vmul.f32 %v583, %v587
    %v596 = vlaneseq
    %v597 = vshrl.u32 %v596, 7
    %v598 = vsub.s32 0, %v597
    %v599 = vrot.slane %v330, %v598
    %v600 = vadd.f32 %v588, %v599
    %v601 = vadd.f32 %v589, %v599
    %v602 = vadd.f32 %v590, %v599
    %v603 = vadd.f32 %v591, %v599
    %v604 = vadd.f32 %v592, %v599
    %v605 = vadd.f32 %v593, %v599
    %v606 = vadd.f32 %v594, %v599
    %v607 = vadd.f32 %v595, %v599
    %v608 = vsub.f32 0.0, %v600
    %v609 = vsub.f32 0.0, %v601
    %v610 = vsub.f32 0.0, %v602
    %v611 = vsub.f32 0.0, %v603
    %v612 = vsub.f32 0.0, %v604
    %v613 = vsub.f32 0.0, %v605
    %v614 = vsub.f32 0.0, %v606
    %v615 = vsub.f32 0.0, %v607
    %v616 = vmul.f32 %v608, 1.442695
    %v617 = vpow.pop %v616
    %v618 = vmul.f32 %v609, 1.442695
    %v619 = vpow.pop %v618
    %v620 = vmul.f32 %v610, 1.442695
    %v621 = vpow.pop %v620
    %v622 = vmul.f32 %v611, 1.442695
    %v623 = vpow.pop %v622
    %v624 = vmul.f32 %v612, 1.442695
    %v625 = vpow.pop %v624
    %v626 = vmul.f32 %v613, 1.442695
    %v627 = vpow.pop %v626
    %v628 = vmul.f32 %v614, 1.442695
    %v629 = vpow.pop %v628
    %v630 = vmul.f32 %v615, 1.442695
    %v631 = vpow.pop %v630
    %v632 = vadd.f32 %v617, 1.0
    %v633 = vadd.f32 %v619, 1.0
    %v634 = vadd.f32 %v621, 1.0
    %v635 = vadd.f32 %v623, 1.0
    %v636 = vadd.f32 %v625, 1.0
    %v637 = vadd.f32 %v627, 1.0
    %v638 = vadd.f32 %v629, 1.0
    %v639 = vadd.f32 %v631, 1.0
    %v640 = vrcp.pop %v632
    %v641 = vrcp.pop %v633
    %v642 = vrcp.pop %v634
    %v643 = vrcp.pop %v635
    %v644 = vrcp.pop %v636
    %v645 = vrcp.pop %v637
    %v646 = vrcp.pop %v638
    %v647 = vrcp.pop %v639
    %v648 = vmul.f32 %v600, %v640
    %v649 = vmul.f32 %v601, %v641
    %v650 = vmul.f32 %v602, %v642
    %v651 = vmul.f32 %v603, %v643
    %v652 = vmul.f32 %v604, %v644
    %v653 = vmul.f32 %v605, %v645
    %v654 = vmul.f32 %v606, %v646
    %v655 = vmul.f32 %v607, %v647
    %v656 = vlaneseq
    %v657 = vshrl.u32 %v656, 7
    %v658 = vsub.s32 0, %v657
    %v659 = vrot.slane %v334, %v658
    %v660 = vmul.f32 %v648, %v659
    %v661 = vmul.f32 %v649, %v659
    %v662 = vmul.f32 %v650, %v659
    %v663 = vmul.f32 %v651, %v659
    %v664 = vmul.f32 %v652, %v659
    %v665 = vmul.f32 %v653, %v659
    %v666 = vmul.f32 %v654, %v659
    %v667 = vmul.f32 %v655, %v659
    %v668 = vsel %vm462, %v660, 0.0
    %669 = vadd.xlane.f32.xlu0 %v668
    %v670 = vpop.xlane.xlu0 %669
    %v671 = vsel %vm462, %v661, 0.0
    %672 = vadd.xlane.f32.xlu0 %v671
    %v673 = vpop.xlane.xlu0 %672
    %v674 = vsel %vm462, %v662, 0.0
    %675 = vadd.xlane.f32.xlu0 %v674
    %v676 = vpop.xlane.xlu0 %675
    %v677 = vsel %vm462, %v663, 0.0
    %678 = vadd.xlane.f32.xlu0 %v677
    %v679 = vpop.xlane.xlu0 %678
    %v680 = vsel %vm462, %v664, 0.0
    %681 = vadd.xlane.f32.xlu0 %v680
    %v682 = vpop.xlane.xlu0 %681
    %v683 = vsel %vm462, %v665, 0.0
    %684 = vadd.xlane.f32.xlu0 %v683
    %v685 = vpop.xlane.xlu0 %684
    %v686 = vsel %vm462, %v666, 0.0
    %687 = vadd.xlane.f32.xlu0 %v686
    %v688 = vpop.xlane.xlu0 %687
    %v689 = vsel %vm462, %v667, 0.0
    %690 = vadd.xlane.f32.xlu0 %v689
    %v691 = vpop.xlane.xlu0 %690
    %s692 = sld [smem:[#allocation2]]
    %v693 = vstv %s692
    %v694 = vadd.f32 %v670, %v693
    %v695 = vadd.f32 %v673, %v693
    %v696 = vadd.f32 %v676, %v693
    %v697 = vadd.f32 %v679, %v693
    %v698 = vadd.f32 %v682, %v693
    %v699 = vadd.f32 %v685, %v693
    %v700 = vadd.f32 %v688, %v693
    %v701 = vadd.f32 %v691, %v693
    %v702 = vlaneseq
    %v703 = vshrl.u32 %v702, 7
    %v704 = vsub.s32 0, %v703
    %v705 = vrot.slane %v335, %v704
    %v706 = vmul.f32 %v648, %v705
    %v707 = vmul.f32 %v649, %v705
    %v708 = vmul.f32 %v650, %v705
    %v709 = vmul.f32 %v651, %v705
    %v710 = vmul.f32 %v652, %v705
    %v711 = vmul.f32 %v653, %v705
    %v712 = vmul.f32 %v654, %v705
    %v713 = vmul.f32 %v655, %v705
    %v714 = vsel %vm462, %v706, 0.0
    %715 = vadd.xlane.f32.xlu0 %v714
    %v716 = vpop.xlane.xlu0 %715
    %v717 = vsel %vm462, %v707, 0.0
    %718 = vadd.xlane.f32.xlu0 %v717
    %v719 = vpop.xlane.xlu0 %718
    %v720 = vsel %vm462, %v708, 0.0
    %721 = vadd.xlane.f32.xlu0 %v720
    %v722 = vpop.xlane.xlu0 %721
    %v723 = vsel %vm462, %v709, 0.0
    %724 = vadd.xlane.f32.xlu0 %v723
    %v725 = vpop.xlane.xlu0 %724
    %v726 = vsel %vm462, %v710, 0.0
    %727 = vadd.xlane.f32.xlu0 %v726
    %v728 = vpop.xlane.xlu0 %727
    %v729 = vsel %vm462, %v711, 0.0
    %730 = vadd.xlane.f32.xlu0 %v729
    %v731 = vpop.xlane.xlu0 %730
    %v732 = vsel %vm462, %v712, 0.0
    %733 = vadd.xlane.f32.xlu0 %v732
    %v734 = vpop.xlane.xlu0 %733
    %v735 = vsel %vm462, %v713, 0.0
    %736 = vadd.xlane.f32.xlu0 %v735
    %v737 = vpop.xlane.xlu0 %736
    %s738 = sld [smem:[#allocation2 + $0x1]]
    %v739 = vstv %s738
    %v740 = vadd.f32 %v716, %v739
    %v741 = vadd.f32 %v719, %v739
    %v742 = vadd.f32 %v722, %v739
    %v743 = vadd.f32 %v725, %v739
    %v744 = vadd.f32 %v728, %v739
    %v745 = vadd.f32 %v731, %v739
    %v746 = vadd.f32 %v734, %v739
    %v747 = vadd.f32 %v737, %v739
    %v748 = vlaneseq
    %v749 = vshrl.u32 %v748, 7
    %v750 = vsub.s32 0, %v749
    %v751 = vrot.slane %v336, %v750
    %v752 = vmul.f32 %v648, %v751
    %v753 = vmul.f32 %v649, %v751
    %v754 = vmul.f32 %v650, %v751
    %v755 = vmul.f32 %v651, %v751
    %v756 = vmul.f32 %v652, %v751
    %v757 = vmul.f32 %v653, %v751
    %v758 = vmul.f32 %v654, %v751
    %v759 = vmul.f32 %v655, %v751
    %v760 = vsel %vm462, %v752, 0.0
    %761 = vadd.xlane.f32.xlu0 %v760
    %v762 = vpop.xlane.xlu0 %761
    %v763 = vsel %vm462, %v753, 0.0
    %764 = vadd.xlane.f32.xlu0 %v763
    %v765 = vpop.xlane.xlu0 %764
    %v766 = vsel %vm462, %v754, 0.0
    %767 = vadd.xlane.f32.xlu0 %v766
    %v768 = vpop.xlane.xlu0 %767
    %v769 = vsel %vm462, %v755, 0.0
    %770 = vadd.xlane.f32.xlu0 %v769
    %v771 = vpop.xlane.xlu0 %770
    %v772 = vsel %vm462, %v756, 0.0
    %773 = vadd.xlane.f32.xlu0 %v772
    %v774 = vpop.xlane.xlu0 %773
    %v775 = vsel %vm462, %v757, 0.0
    %776 = vadd.xlane.f32.xlu0 %v775
    %v777 = vpop.xlane.xlu0 %776
    %v778 = vsel %vm462, %v758, 0.0
    %779 = vadd.xlane.f32.xlu0 %v778
    %v780 = vpop.xlane.xlu0 %779
    %v781 = vsel %vm462, %v759, 0.0
    %782 = vadd.xlane.f32.xlu0 %v781
    %v783 = vpop.xlane.xlu0 %782
    %s784 = sld [smem:[#allocation2 + $0x2]]
    %v785 = vstv %s784
    %v786 = vadd.f32 %v762, %v785
    %v787 = vadd.f32 %v765, %v785
    %v788 = vadd.f32 %v768, %v785
    %v789 = vadd.f32 %v771, %v785
    %v790 = vadd.f32 %v774, %v785
    %v791 = vadd.f32 %v777, %v785
    %v792 = vadd.f32 %v780, %v785
    %v793 = vadd.f32 %v783, %v785
    %v794 = vmax.f32 %v694, %v740
    %v795 = vmax.f32 %v695, %v741
    %v796 = vmax.f32 %v696, %v742
    %v797 = vmax.f32 %v697, %v743
    %v798 = vmax.f32 %v698, %v744
    %v799 = vmax.f32 %v699, %v745
    %v800 = vmax.f32 %v700, %v746
    %v801 = vmax.f32 %v701, %v747
    %v802 = vmax.f32 %v794, %v786
    %v803 = vmax.f32 %v795, %v787
    %v804 = vmax.f32 %v796, %v788
    %v805 = vmax.f32 %v797, %v789
    %v806 = vmax.f32 %v798, %v790
    %v807 = vmax.f32 %v799, %v791
    %v808 = vmax.f32 %v800, %v792
    %v809 = vmax.f32 %v801, %v793
    %v810 = vsub.f32 %v694, %v802
    %v811 = vsub.f32 %v695, %v803
    %v812 = vsub.f32 %v696, %v804
    %v813 = vsub.f32 %v697, %v805
    %v814 = vsub.f32 %v698, %v806
    %v815 = vsub.f32 %v699, %v807
    %v816 = vsub.f32 %v700, %v808
    %v817 = vsub.f32 %v701, %v809
    %v818 = vmul.f32 %v810, 1.442695
    %v819 = vpow.pop %v818
    %v820 = vmul.f32 %v811, 1.442695
    %v821 = vpow.pop %v820
    %v822 = vmul.f32 %v812, 1.442695
    %v823 = vpow.pop %v822
    %v824 = vmul.f32 %v813, 1.442695
    %v825 = vpow.pop %v824
    %v826 = vmul.f32 %v814, 1.442695
    %v827 = vpow.pop %v826
    %v828 = vmul.f32 %v815, 1.442695
    %v829 = vpow.pop %v828
    %v830 = vmul.f32 %v816, 1.442695
    %v831 = vpow.pop %v830
    %v832 = vmul.f32 %v817, 1.442695
    %v833 = vpow.pop %v832
    %v834 = vsub.f32 %v740, %v802
    %v835 = vsub.f32 %v741, %v803
    %v836 = vsub.f32 %v742, %v804
    %v837 = vsub.f32 %v743, %v805
    %v838 = vsub.f32 %v744, %v806
    %v839 = vsub.f32 %v745, %v807
    %v840 = vsub.f32 %v746, %v808
    %v841 = vsub.f32 %v747, %v809
    %v842 = vmul.f32 %v834, 1.442695
    %v843 = vpow.pop %v842
    %v844 = vmul.f32 %v835, 1.442695
    %v845 = vpow.pop %v844
    %v846 = vmul.f32 %v836, 1.442695
    %v847 = vpow.pop %v846
    %v848 = vmul.f32 %v837, 1.442695
    %v849 = vpow.pop %v848
    %v850 = vmul.f32 %v838, 1.442695
    %v851 = vpow.pop %v850
    %v852 = vmul.f32 %v839, 1.442695
    %v853 = vpow.pop %v852
    %v854 = vmul.f32 %v840, 1.442695
    %v855 = vpow.pop %v854
    %v856 = vmul.f32 %v841, 1.442695
    %v857 = vpow.pop %v856
    %v858 = vsub.f32 %v786, %v802
    %v859 = vsub.f32 %v787, %v803
    %v860 = vsub.f32 %v788, %v804
    %v861 = vsub.f32 %v789, %v805
    %v862 = vsub.f32 %v790, %v806
    %v863 = vsub.f32 %v791, %v807
    %v864 = vsub.f32 %v792, %v808
    %v865 = vsub.f32 %v793, %v809
    %v866 = vmul.f32 %v858, 1.442695
    %v867 = vpow.pop %v866
    %v868 = vmul.f32 %v859, 1.442695
    %v869 = vpow.pop %v868
    %v870 = vmul.f32 %v860, 1.442695
    %v871 = vpow.pop %v870
    %v872 = vmul.f32 %v861, 1.442695
    %v873 = vpow.pop %v872
    %v874 = vmul.f32 %v862, 1.442695
    %v875 = vpow.pop %v874
    %v876 = vmul.f32 %v863, 1.442695
    %v877 = vpow.pop %v876
    %v878 = vmul.f32 %v864, 1.442695
    %v879 = vpow.pop %v878
    %v880 = vmul.f32 %v865, 1.442695
    %v881 = vpow.pop %v880
    %v882 = vadd.f32 %v819, %v843
    %v883 = vadd.f32 %v821, %v845
    %v884 = vadd.f32 %v823, %v847
    %v885 = vadd.f32 %v825, %v849
    %v886 = vadd.f32 %v827, %v851
    %v887 = vadd.f32 %v829, %v853
    %v888 = vadd.f32 %v831, %v855
    %v889 = vadd.f32 %v833, %v857
    %v890 = vadd.f32 %v882, %v867
    %v891 = vadd.f32 %v883, %v869
    %v892 = vadd.f32 %v884, %v871
    %v893 = vadd.f32 %v885, %v873
    %v894 = vadd.f32 %v886, %v875
    %v895 = vadd.f32 %v887, %v877
    %v896 = vadd.f32 %v888, %v879
    %v897 = vadd.f32 %v889, %v881
    %v898 = vrcp.pop %v890
    %v899 = vrcp.pop %v891
    %v900 = vrcp.pop %v892
    %v901 = vrcp.pop %v893
    %v902 = vrcp.pop %v894
    %v903 = vrcp.pop %v895
    %v904 = vrcp.pop %v896
    %v905 = vrcp.pop %v897
    %v906 = vmul.f32 %v819, %v290
    %v907 = vmul.f32 %v821, %v295
    %v908 = vmul.f32 %v823, %v300
    %v909 = vmul.f32 %v825, %v305
    %v910 = vmul.f32 %v827, %v310
    %v911 = vmul.f32 %v829, %v315
    %v912 = vmul.f32 %v831, %v320
    %v913 = vmul.f32 %v833, %v325
    %v914 = vmul.f32 %v843, %v290
    %v915 = vmul.f32 %v845, %v295
    %v916 = vmul.f32 %v847, %v300
    %v917 = vmul.f32 %v849, %v305
    %v918 = vmul.f32 %v851, %v310
    %v919 = vmul.f32 %v853, %v315
    %v920 = vmul.f32 %v855, %v320
    %v921 = vmul.f32 %v857, %v325
    %930 = vrot.lane.b32.xlu0 %v914, 96
    %v931 = vpop.permute.xlu0 %930
    %932 = vrot.lane.b32.xlu0 %v915, 96
    %v933 = vpop.permute.xlu0 %932
    %934 = vrot.lane.b32.xlu0 %v916, 96
    %v935 = vpop.permute.xlu0 %934
    %936 = vrot.lane.b32.xlu0 %v917, 96
    %v937 = vpop.permute.xlu0 %936
    %938 = vrot.lane.b32.xlu0 %v918, 96
    %v939 = vpop.permute.xlu0 %938
    %940 = vrot.lane.b32.xlu0 %v919, 96
    %v941 = vpop.permute.xlu0 %940
    %942 = vrot.lane.b32.xlu0 %v920, 96
    %v943 = vpop.permute.xlu0 %942
    %944 = vrot.lane.b32.xlu0 %v921, 96
    %v945 = vpop.permute.xlu0 %944
    %v954 = vadd.f32 %v906, %v931
    %v955 = vadd.f32 %v907, %v933
    %v956 = vadd.f32 %v908, %v935
    %v957 = vadd.f32 %v909, %v937
    %v958 = vadd.f32 %v910, %v939
    %v959 = vadd.f32 %v911, %v941
    %v960 = vadd.f32 %v912, %v943
    %v961 = vadd.f32 %v913, %v945
    %v962 = vmul.f32 %v867, %v290
    %v963 = vmul.f32 %v869, %v295
    %v964 = vmul.f32 %v871, %v300
    %v965 = vmul.f32 %v873, %v305
    %v966 = vmul.f32 %v875, %v310
    %v967 = vmul.f32 %v877, %v315
    %v968 = vmul.f32 %v879, %v320
    %v969 = vmul.f32 %v881, %v325
    %978 = vrot.lane.b32.xlu0 %v962, 64
    %v979 = vpop.permute.xlu0 %978
    %980 = vrot.lane.b32.xlu0 %v963, 64
    %v981 = vpop.permute.xlu0 %980
    %982 = vrot.lane.b32.xlu0 %v964, 64
    %v983 = vpop.permute.xlu0 %982
    %984 = vrot.lane.b32.xlu0 %v965, 64
    %v985 = vpop.permute.xlu0 %984
    %986 = vrot.lane.b32.xlu0 %v966, 64
    %v987 = vpop.permute.xlu0 %986
    %988 = vrot.lane.b32.xlu0 %v967, 64
    %v989 = vpop.permute.xlu0 %988
    %990 = vrot.lane.b32.xlu0 %v968, 64
    %v991 = vpop.permute.xlu0 %990
    %992 = vrot.lane.b32.xlu0 %v969, 64
    %v993 = vpop.permute.xlu0 %992
    %v1002 = vadd.f32 %v954, %v979
    %v1003 = vadd.f32 %v955, %v981
    %v1004 = vadd.f32 %v956, %v983
    %v1005 = vadd.f32 %v957, %v985
    %v1006 = vadd.f32 %v958, %v987
    %v1007 = vadd.f32 %v959, %v989
    %v1008 = vadd.f32 %v960, %v991
    %v1009 = vadd.f32 %v961, %v993
    %v1010 = vmul.f32 %v1002, %v898
    %v1011 = vmul.f32 %v1003, %v899
    %v1012 = vmul.f32 %v1004, %v900
    %v1013 = vmul.f32 %v1005, %v901
    %v1014 = vmul.f32 %v1006, %v902
    %v1015 = vmul.f32 %v1007, %v903
    %v1016 = vmul.f32 %v1008, %v904
    %v1017 = vmul.f32 %v1009, %v905
    %1026 = vrot.lane.b32.xlu0 %v290, 32
    %v1027 = vpop.permute.xlu0 %1026
    %1028 = vrot.lane.b32.xlu0 %v295, 32
    %v1029 = vpop.permute.xlu0 %1028
    %1030 = vrot.lane.b32.xlu0 %v300, 32
    %v1031 = vpop.permute.xlu0 %1030
    %1032 = vrot.lane.b32.xlu0 %v305, 32
    %v1033 = vpop.permute.xlu0 %1032
    %1034 = vrot.lane.b32.xlu0 %v310, 32
    %v1035 = vpop.permute.xlu0 %1034
    %1036 = vrot.lane.b32.xlu0 %v315, 32
    %v1037 = vpop.permute.xlu0 %1036
    %1038 = vrot.lane.b32.xlu0 %v320, 32
    %v1039 = vpop.permute.xlu0 %1038
    %1040 = vrot.lane.b32.xlu0 %v325, 32
    %v1041 = vpop.permute.xlu0 %1040
    %v1050 = vadd.f32 %v290, %v1027
    %v1051 = vadd.f32 %v295, %v1029
    %v1052 = vadd.f32 %v300, %v1031
    %v1053 = vadd.f32 %v305, %v1033
    %v1054 = vadd.f32 %v310, %v1035
    %v1055 = vadd.f32 %v315, %v1037
    %v1056 = vadd.f32 %v320, %v1039
    %v1057 = vadd.f32 %v325, %v1041
    %v1058 = vadd.f32 %v1050, %v1010
    %v1059 = vadd.f32 %v1051, %v1011
    %v1060 = vadd.f32 %v1052, %v1012
    %v1061 = vadd.f32 %v1053, %v1013
    %v1062 = vadd.f32 %v1054, %v1014
    %v1063 = vadd.f32 %v1055, %v1015
    %v1064 = vadd.f32 %v1056, %v1016
    %v1065 = vadd.f32 %v1057, %v1017
    %v1066 = vld [vmem:[%s2 + $0x80] sm:$0xff]
    %v1067 = vld [vmem:[%s2 + $0x88] sm:$0xff]
    %v1068 = vld [vmem:[%s2 + $0x90] sm:$0xff]
    %v1069 = vld [vmem:[%s2 + $0x98] sm:$0xff]
    %v1070 = vlaneseq
    %v1071 = vshrl.u32 %v1070, 7
    %v1072 = vsub.s32 0, %v1071
    %v1073 = vrot.slane %v331, %v1072
    %v1075 = vsel %vm462, %v1058, 0
    %v1078 = vsel %vm462, %v1059, 0
    %v1081 = vsel %vm462, %v1060, 0
    %v1084 = vsel %vm462, %v1061, 0
    %v1087 = vsel %vm462, %v1062, 0
    %v1090 = vsel %vm462, %v1063, 0
    %v1093 = vsel %vm462, %v1064, 0
    %v1096 = vsel %vm462, %v1065, 0
    %1098 = vmatprep.subr.mxu0 0.0
    %1099 = vmatpush1.msra.mxu0 0.0
    %1100 = vmatprep.subr.mxu0 0.0
    %1101 = vmatpush1.msra.mxu0 0.0
    %1102 = vmatprep.subr.mxu0 0.0
    %1103 = vmatpush1.msra.mxu0 0.0
    %1104 = vmatprep.subr.mxu0 0.0
    %1105 = vmatpush1.msra.mxu0 0.0
    %1106 = vmatprep.subr.mxu0 0.0
    %1107 = vmatpush1.msra.mxu0 0.0
    %1108 = vmatprep.subr.mxu0 0.0
    %1109 = vmatpush1.msra.mxu0 0.0
    %1110 = vmatprep.subr.mxu0 0.0
    %1111 = vmatpush1.msra.mxu0 0.0
    %1112 = vmatprep.subr.mxu0 0.0
    %1113 = vmatpush1.msra.mxu0 0.0
    %1114 = vmatprep.subr.mxu0 0.0
    %1115 = vmatpush1.msra.mxu0 0.0
    %1116 = vmatprep.subr.mxu0 0.0
    %1117 = vmatpush1.msra.mxu0 0.0
    %1118 = vmatprep.subr.mxu0 0.0
    %1119 = vmatpush1.msra.mxu0 0.0
    %1120 = vmatprep.subr.mxu0 0.0
    %1121 = vmatpush1.msra.mxu0 0.0
    %1122 = vmatprep.subr.mxu0 0.0
    %1123 = vmatpush1.msra.mxu0 %v1069
    %1124 = vmatprep.subr.mxu0 0.0
    %1125 = vmatpush1.msra.mxu0 %v1068
    %1126 = vmatprep.subr.mxu0 0.0
    %1127 = vmatpush1.msra.mxu0 %v1067
    %1128 = vmatprep.subr.mxu0 0.0
    %1129 = vmatpush1.msra.mxu0 %v1066
    %1130 = vmatprep.subr.mxu0 0.0
    %1131 = vmatpush2.msra.mxu0 0.0
    %1132 = vmatprep.subr.mxu0 0.0
    %1133 = vmatpush2.msra.mxu0 0.0
    %1134 = vmatprep.subr.mxu0 0.0
    %1135 = vmatpush2.msra.mxu0 0.0
    %1136 = vmatprep.subr.mxu0 0.0
    %1137 = vmatpush2.msra.mxu0 0.0
    %1138 = vmatprep.subr.mxu0 0.0
    %1139 = vmatpush2.msra.mxu0 0.0
    %1140 = vmatprep.subr.mxu0 0.0
    %1141 = vmatpush2.msra.mxu0 0.0
    %1142 = vmatprep.subr.mxu0 0.0
    %1143 = vmatpush2.msra.mxu0 0.0
    %1144 = vmatprep.subr.mxu0 0.0
    %1145 = vmatpush2.msra.mxu0 0.0
    %1146 = vmatprep.subr.mxu0 0.0
    %1147 = vmatpush2.msra.mxu0 0.0
    %1148 = vmatprep.subr.mxu0 0.0
    %1149 = vmatpush2.msra.mxu0 0.0
    %1150 = vmatprep.subr.mxu0 0.0
    %1151 = vmatpush2.msra.mxu0 0.0
    %1152 = vmatprep.subr.mxu0 0.0
    %1153 = vmatpush2.msra.mxu0 0.0
    %1154 = vmatprep.subr.mxu0 0.0
    %1155 = vmatpush2.msra.mxu0 0.0
    %1156 = vmatprep.subr.mxu0 0.0
    %1157 = vmatpush2.msra.mxu0 0.0
    %1158 = vmatprep.subr.mxu0 0.0
    %1159 = vmatpush2.msra.mxu0 0.0
    %1160 = vmatprep.subr.mxu0 0.0
    %1161 = vmatpush2.msra.mxu0 0.0
    %1162 = vmatprep.mubr.f32.mxu0 0.0
    %1163 = vmatmul.mubr.f32.gmra.mxu0 %v1075
    %v1164 = vpop.f32.mrf.mxu0
    %v1165 = vadd.f32 %v1073, %v1164
    %v1166 = vpop.f32.mrf.mxu0
    %1167 = vmatprep.mubr.f32.mxu0 0.0
    %1168 = vmatmul.mubr.f32.gmra.mxu0 %v1078
    %v1169 = vpop.f32.mrf.mxu0
    %v1170 = vadd.f32 %v1073, %v1169
    %v1171 = vpop.f32.mrf.mxu0
    %1172 = vmatprep.mubr.f32.mxu0 0.0
    %1173 = vmatmul.mubr.f32.gmra.mxu0 %v1081
    %v1174 = vpop.f32.mrf.mxu0
    %v1175 = vadd.f32 %v1073, %v1174
    %v1176 = vpop.f32.mrf.mxu0
    %1177 = vmatprep.mubr.f32.mxu0 0.0
    %1178 = vmatmul.mubr.f32.gmra.mxu0 %v1084
    %v1179 = vpop.f32.mrf.mxu0
    %v1180 = vadd.f32 %v1073, %v1179
    %v1181 = vpop.f32.mrf.mxu0
    %1182 = vmatprep.mubr.f32.mxu0 0.0
    %1183 = vmatmul.mubr.f32.gmra.mxu0 %v1087
    %v1184 = vpop.f32.mrf.mxu0
    %v1185 = vadd.f32 %v1073, %v1184
    %v1186 = vpop.f32.mrf.mxu0
    %1187 = vmatprep.mubr.f32.mxu0 0.0
    %1188 = vmatmul.mubr.f32.gmra.mxu0 %v1090
    %v1189 = vpop.f32.mrf.mxu0
    %v1190 = vadd.f32 %v1073, %v1189
    %v1191 = vpop.f32.mrf.mxu0
    %1192 = vmatprep.mubr.f32.mxu0 0.0
    %1193 = vmatmul.mubr.f32.gmra.mxu0 %v1093
    %v1194 = vpop.f32.mrf.mxu0
    %v1195 = vadd.f32 %v1073, %v1194
    %v1196 = vpop.f32.mrf.mxu0
    %1197 = vmatprep.mubr.f32.mxu0 0.0
    %1198 = vmatmul.mubr.f32.gmra.mxu0 %v1096
    %v1199 = vpop.f32.mrf.mxu0
    %v1200 = vadd.f32 %v1073, %v1199
    %v1201 = vpop.f32.mrf.mxu0
    %1202 = vdwg.mxu0
    %v1203 = vsel %vm462, %v1165, 0.0
    %1204 = vadd.xlane.f32.xlu0 %v1203
    %v1205 = vpop.xlane.xlu0 %1204
    %v1206 = vsel %vm462, %v1170, 0.0
    %1207 = vadd.xlane.f32.xlu0 %v1206
    %v1208 = vpop.xlane.xlu0 %1207
    %v1209 = vsel %vm462, %v1175, 0.0
    %1210 = vadd.xlane.f32.xlu0 %v1209
    %v1211 = vpop.xlane.xlu0 %1210
    %v1212 = vsel %vm462, %v1180, 0.0
    %1213 = vadd.xlane.f32.xlu0 %v1212
    %v1214 = vpop.xlane.xlu0 %1213
    %v1215 = vsel %vm462, %v1185, 0.0
    %1216 = vadd.xlane.f32.xlu0 %v1215
    %v1217 = vpop.xlane.xlu0 %1216
    %v1218 = vsel %vm462, %v1190, 0.0
    %1219 = vadd.xlane.f32.xlu0 %v1218
    %v1220 = vpop.xlane.xlu0 %1219
    %v1221 = vsel %vm462, %v1195, 0.0
    %1222 = vadd.xlane.f32.xlu0 %v1221
    %v1223 = vpop.xlane.xlu0 %1222
    %v1224 = vsel %vm462, %v1200, 0.0
    %1225 = vadd.xlane.f32.xlu0 %v1224
    %v1226 = vpop.xlane.xlu0 %1225
    %v1227 = vmul.f32 %v1205, %v487
    %v1228 = vmul.f32 %v1208, %v487
    %v1229 = vmul.f32 %v1211, %v487
    %v1230 = vmul.f32 %v1214, %v487
    %v1231 = vmul.f32 %v1217, %v487
    %v1232 = vmul.f32 %v1220, %v487
    %v1233 = vmul.f32 %v1223, %v487
    %v1234 = vmul.f32 %v1226, %v487
    %v1235 = vmul.f32 %v1165, %v1165
    %v1236 = vmul.f32 %v1170, %v1170
    %v1237 = vmul.f32 %v1175, %v1175
    %v1238 = vmul.f32 %v1180, %v1180
    %v1239 = vmul.f32 %v1185, %v1185
    %v1240 = vmul.f32 %v1190, %v1190
    %v1241 = vmul.f32 %v1195, %v1195
    %v1242 = vmul.f32 %v1200, %v1200
    %v1243 = vsel %vm462, %v1235, 0.0
    %1244 = vadd.xlane.f32.xlu0 %v1243
    %v1245 = vpop.xlane.xlu0 %1244
    %v1246 = vsel %vm462, %v1236, 0.0
    %1247 = vadd.xlane.f32.xlu0 %v1246
    %v1248 = vpop.xlane.xlu0 %1247
    %v1249 = vsel %vm462, %v1237, 0.0
    %1250 = vadd.xlane.f32.xlu0 %v1249
    %v1251 = vpop.xlane.xlu0 %1250
    %v1252 = vsel %vm462, %v1238, 0.0
    %1253 = vadd.xlane.f32.xlu0 %v1252
    %v1254 = vpop.xlane.xlu0 %1253
    %v1255 = vsel %vm462, %v1239, 0.0
    %1256 = vadd.xlane.f32.xlu0 %v1255
    %v1257 = vpop.xlane.xlu0 %1256
    %v1258 = vsel %vm462, %v1240, 0.0
    %1259 = vadd.xlane.f32.xlu0 %v1258
    %v1260 = vpop.xlane.xlu0 %1259
    %v1261 = vsel %vm462, %v1241, 0.0
    %1262 = vadd.xlane.f32.xlu0 %v1261
    %v1263 = vpop.xlane.xlu0 %1262
    %v1264 = vsel %vm462, %v1242, 0.0
    %1265 = vadd.xlane.f32.xlu0 %v1264
    %v1266 = vpop.xlane.xlu0 %1265
    %v1267 = vmul.f32 %v1245, %v487
    %v1268 = vmul.f32 %v1248, %v487
    %v1269 = vmul.f32 %v1251, %v487
    %v1270 = vmul.f32 %v1254, %v487
    %v1271 = vmul.f32 %v1257, %v487
    %v1272 = vmul.f32 %v1260, %v487
    %v1273 = vmul.f32 %v1263, %v487
    %v1274 = vmul.f32 %v1266, %v487
    %v1275 = vmul.f32 %v1227, %v1227
    %v1276 = vmul.f32 %v1228, %v1228
    %v1277 = vmul.f32 %v1229, %v1229
    %v1278 = vmul.f32 %v1230, %v1230
    %v1279 = vmul.f32 %v1231, %v1231
    %v1280 = vmul.f32 %v1232, %v1232
    %v1281 = vmul.f32 %v1233, %v1233
    %v1282 = vmul.f32 %v1234, %v1234
    %v1283 = vsub.f32 %v1267, %v1275
    %v1284 = vsub.f32 %v1268, %v1276
    %v1285 = vsub.f32 %v1269, %v1277
    %v1286 = vsub.f32 %v1270, %v1278
    %v1287 = vsub.f32 %v1271, %v1279
    %v1288 = vsub.f32 %v1272, %v1280
    %v1289 = vsub.f32 %v1273, %v1281
    %v1290 = vsub.f32 %v1274, %v1282
    %v1291 = vsub.f32 %v1165, %v1227
    %v1292 = vsub.f32 %v1170, %v1228
    %v1293 = vsub.f32 %v1175, %v1229
    %v1294 = vsub.f32 %v1180, %v1230
    %v1295 = vsub.f32 %v1185, %v1231
    %v1296 = vsub.f32 %v1190, %v1232
    %v1297 = vsub.f32 %v1195, %v1233
    %v1298 = vsub.f32 %v1200, %v1234
    %v1299 = vadd.f32 %v1283, 1e-05
    %v1300 = vadd.f32 %v1284, 1e-05
    %v1301 = vadd.f32 %v1285, 1e-05
    %v1302 = vadd.f32 %v1286, 1e-05
    %v1303 = vadd.f32 %v1287, 1e-05
    %v1304 = vadd.f32 %v1288, 1e-05
    %v1305 = vadd.f32 %v1289, 1e-05
    %v1306 = vadd.f32 %v1290, 1e-05
    %v1307 = vrsqrt.pop %v1299
    %v1308 = vrsqrt.pop %v1300
    %v1309 = vrsqrt.pop %v1301
    %v1310 = vrsqrt.pop %v1302
    %v1311 = vrsqrt.pop %v1303
    %v1312 = vrsqrt.pop %v1304
    %v1313 = vrsqrt.pop %v1305
    %v1314 = vrsqrt.pop %v1306
    %v1315 = vmul.f32 %v1291, %v1307
    %v1316 = vmul.f32 %v1292, %v1308
    %v1317 = vmul.f32 %v1293, %v1309
    %v1318 = vmul.f32 %v1294, %v1310
    %v1319 = vmul.f32 %v1295, %v1311
    %v1320 = vmul.f32 %v1296, %v1312
    %v1321 = vmul.f32 %v1297, %v1313
    %v1322 = vmul.f32 %v1298, %v1314
    %v1323 = vlaneseq
    %v1324 = vshrl.u32 %v1323, 7
    %v1325 = vsub.s32 0, %v1324
    %v1326 = vrot.slane %v332, %v1325
    %v1327 = vmul.f32 %v1315, %v1326
    %v1328 = vmul.f32 %v1316, %v1326
    %v1329 = vmul.f32 %v1317, %v1326
    %v1330 = vmul.f32 %v1318, %v1326
    %v1331 = vmul.f32 %v1319, %v1326
    %v1332 = vmul.f32 %v1320, %v1326
    %v1333 = vmul.f32 %v1321, %v1326
    %v1334 = vmul.f32 %v1322, %v1326
    %v1335 = vlaneseq
    %v1336 = vshrl.u32 %v1335, 7
    %v1337 = vsub.s32 0, %v1336
    %v1338 = vrot.slane %v333, %v1337
    %v1339 = vadd.f32 %v1327, %v1338
    %v1340 = vadd.f32 %v1328, %v1338
    %v1341 = vadd.f32 %v1329, %v1338
    %v1342 = vadd.f32 %v1330, %v1338
    %v1343 = vadd.f32 %v1331, %v1338
    %v1344 = vadd.f32 %v1332, %v1338
    %v1345 = vadd.f32 %v1333, %v1338
    %v1346 = vadd.f32 %v1334, %v1338
    %v1347 = vsub.f32 0.0, %v1339
    %v1348 = vsub.f32 0.0, %v1340
    %v1349 = vsub.f32 0.0, %v1341
    %v1350 = vsub.f32 0.0, %v1342
    %v1351 = vsub.f32 0.0, %v1343
    %v1352 = vsub.f32 0.0, %v1344
    %v1353 = vsub.f32 0.0, %v1345
    %v1354 = vsub.f32 0.0, %v1346
    %v1355 = vmul.f32 %v1347, 1.442695
    %v1356 = vpow.pop %v1355
    %v1357 = vmul.f32 %v1348, 1.442695
    %v1358 = vpow.pop %v1357
    %v1359 = vmul.f32 %v1349, 1.442695
    %v1360 = vpow.pop %v1359
    %v1361 = vmul.f32 %v1350, 1.442695
    %v1362 = vpow.pop %v1361
    %v1363 = vmul.f32 %v1351, 1.442695
    %v1364 = vpow.pop %v1363
    %v1365 = vmul.f32 %v1352, 1.442695
    %v1366 = vpow.pop %v1365
    %v1367 = vmul.f32 %v1353, 1.442695
    %v1368 = vpow.pop %v1367
    %v1369 = vmul.f32 %v1354, 1.442695
    %v1370 = vpow.pop %v1369
    %v1371 = vadd.f32 %v1356, 1.0
    %v1372 = vadd.f32 %v1358, 1.0
    %v1373 = vadd.f32 %v1360, 1.0
    %v1374 = vadd.f32 %v1362, 1.0
    %v1375 = vadd.f32 %v1364, 1.0
    %v1376 = vadd.f32 %v1366, 1.0
    %v1377 = vadd.f32 %v1368, 1.0
    %v1378 = vadd.f32 %v1370, 1.0
    %v1379 = vrcp.pop %v1371
    %v1380 = vrcp.pop %v1372
    %v1381 = vrcp.pop %v1373
    %v1382 = vrcp.pop %v1374
    %v1383 = vrcp.pop %v1375
    %v1384 = vrcp.pop %v1376
    %v1385 = vrcp.pop %v1377
    %v1386 = vrcp.pop %v1378
    %v1387 = vmul.f32 %v1339, %v1379
    %v1388 = vmul.f32 %v1340, %v1380
    %v1389 = vmul.f32 %v1341, %v1381
    %v1390 = vmul.f32 %v1342, %v1382
    %v1391 = vmul.f32 %v1343, %v1383
    %v1392 = vmul.f32 %v1344, %v1384
    %v1393 = vmul.f32 %v1345, %v1385
    %v1394 = vmul.f32 %v1346, %v1386
    %1395 = vst.msk [vmem:[#allocation5] sm:$0xff] %vm462, %v1387
    %1396 = vst.msk [vmem:[#allocation5 + $0x8] sm:$0xff] %vm462, %v1388
    %1397 = vst.msk [vmem:[#allocation5 + $0x10] sm:$0xff] %vm462, %v1389
    %1398 = vst.msk [vmem:[#allocation5 + $0x18] sm:$0xff] %vm462, %v1390
    %1399 = vst.msk [vmem:[#allocation5 + $0x20] sm:$0xff] %vm462, %v1391
    %1400 = vst.msk [vmem:[#allocation5 + $0x28] sm:$0xff] %vm462, %v1392
    %1401 = vst.msk [vmem:[#allocation5 + $0x30] sm:$0xff] %vm462, %v1393
    %1402 = vst.msk [vmem:[#allocation5 + $0x38] sm:$0xff] %vm462, %v1394
    // Predicated region
    $region22: #{encoder_head_forward.1} parent=1 // pred_check
      _
    $region23: #{encoder_head_forward.1} parent=1 // pred_check_branch
      %1404 = sbr.rel (0) target = $region25
    $region24: #{encoder_head_forward.1} parent=1 // pred_region
      %s1406 = ssub.s32 1024, 1024
      %1407 = vsyncadd [#allocation3], %s1406
      %s1408 = sshll.u32 [#allocation5], 4
      %s1409 = int_to_ptr.vmem [resolvable:$true] %s1408
      %1414 = dma.vmem_to_hbm [thread:$0]  %s1409, 1024, %s4, [#allocation3], 128, 128, 8
    $region25: #{encoder_head_forward.1} parent=1 // pred_fallthru
      _
    // Predicated region
    $region26: #{encoder_head_forward.1} parent=1 // pred_check
      _
    $region27: #{encoder_head_forward.1} parent=1 // pred_check_branch
      %1416 = sbr.rel (0) target = $region29
    $region28: #{encoder_head_forward.1} parent=1 // pred_region
      %1417 = dma.done [#allocation3], 1024
    $region29: #{encoder_head_forward.1} parent=1 // pred_fallthru
      _
    %1418 = vsyncpa [#allocation3], 1
    %1419 = vsyncpa [#allocation4], 1

</llo_original>
